<compile_context>
chip_gen: v6e
topology: v6e:2x2x1
jax: 0.10.0
libtpu: 0.0.40
codegen_flags: <defaults>
</compile_context>

<pallas_src>
import functools

import jax
import jax.numpy as jnp
from jax.experimental import pallas as pl
from jax.experimental.pallas import tpu as pltpu

Z_DIM = 1
LATENT_DIM = 10


def _round_up(n, m):
    return ((n + m - 1) // m) * m


def _choose_tile(batch, batch_tile):
    """Pick (TB, Bp): Bp = round_up(batch, 128); TB divides Bp, TB <= batch_tile,
    and the grid has >= 2 steps whenever Bp >= 256 (v7x megacore + pipelining)."""
    bp = _round_up(batch, 128)
    m = bp // 128
    cap = max(1, min(batch_tile, bp) // 128)
    best = 1
    for d in range(cap, 0, -1):
        if m % d == 0 and (m == 1 or m // d >= 2):
            best = d
            break
    return 128 * best, bp


def _sigmoid1(h):
    # sigmoid(h) == 0.5 * tanh(0.5 * h) + 0.5 : one EUP op (tanh) instead of
    # exp + reciprocal.  The decoder pushes ~18L sigmoid rows per sample, so
    # this roughly halves traffic through the single EUP slot.
    return 0.5 * jnp.tanh(0.5 * h) + 0.5


def _cvae_kernel(xe_ref,
                 e1w, e1b, e2w, e2b, hdw, hdb,
                 d1wz, d1wx, d1b, d2w, d2b, d3w, d3b, d4w, d4b,
                 out_ref, *, z_dim, latent_dim):
    f32 = jnp.float32
    L = latent_dim
    feat = z_dim + 1
    eps_row = _round_up(feat, 8)           # eps rows start sublane-aligned
    lv_row = _round_up(L, 8)               # log_var rows inside the fused head
    head_rows = _round_up(lv_row + L, 8)   # fused-head output rows (padded)

    cdt = xe_ref.dtype                     # compute dtype (f32 or bf16)
    xe = xe_ref[...]                       # [eps_row + L, TB] == [x | pad | eps]
    eps = xe[eps_row:eps_row + L, :].astype(f32)

    # ---- encoder.block: Linear -> ReLU -> Linear -> Tanh ----
    h = jnp.dot(e1w[...], xe, preferred_element_type=f32) + e1b[...]       # [4L, TB]
    h = jnp.maximum(h, 0.0).astype(cdt)
    latent = jnp.tanh(jnp.dot(e2w[...], h, preferred_element_type=f32)
                      + e2b[...]).astype(cdt)                              # [L, TB]

    # ---- fused encoder heads: rows 0:L = mean, rows lv_row:lv_row+L = log_var
    heads = jnp.dot(hdw[...], latent, preferred_element_type=f32) + hdb[...]
    z_mean = heads[:L, :]                                                   # f32
    z_log_var = heads[lv_row:lv_row + L, :]                                 # f32

    # ---- reparameterization: z = mean + eps * exp(log_var / 2) ----
    z = (z_mean + eps * jnp.exp(z_log_var * 0.5)).astype(cdt)               # [L, TB]

    # ---- decoder: column_stack([z, x[:, -z_dim:]]) as a split matmul
    # (d1wx acts on the packed input slab; zero columns elsewhere) ----
    h = (jnp.dot(d1wz[...], z, preferred_element_type=f32)
         + jnp.dot(d1wx[...], xe, preferred_element_type=f32) + d1b[...])   # [8L, TB]
    h = _sigmoid1(h).astype(cdt)
    h = _sigmoid1(jnp.dot(d2w[...], h, preferred_element_type=f32) + d2b[...]).astype(cdt)
    h = _sigmoid1(jnp.dot(d3w[...], h, preferred_element_type=f32) + d3b[...]).astype(cdt)
    y = jnp.dot(d4w[...], h, preferred_element_type=f32) + d4b[...]         # [8, TB] (rows 1:8 zero)

    # Packed, fully sublane-aligned output: rows [0:head_rows] carry the fused
    # heads (mean / log_var plus deterministic zero padding), the last 8 rows
    # carry the (padded) decoder output.  Two aligned full-row-group stores.
    out_ref[:head_rows, :] = heads
    out_ref[head_rows:, :] = y


def _init_linear(key, fan_in, fan_out):
    """PyTorch nn.Linear default init: U(-1/sqrt(fan_in), 1/sqrt(fan_in)).
    Weights stored PyTorch-style [out, in]; bias as a column [out, 1]."""
    k = 1.0 / (fan_in ** 0.5)
    wk, bk = jax.random.split(key)
    w = jax.random.uniform(wk, (fan_out, fan_in), jnp.float32, -k, k)
    b = jax.random.uniform(bk, (fan_out, 1), jnp.float32, -k, k)
    return w, b


def init_cvae_params(key, z_dim=Z_DIM, latent_dim=LATENT_DIM):
    keys = jax.random.split(key, 8)
    params = []
    # encoder.block
    params += _init_linear(keys[0], z_dim + 1, latent_dim * 4)
    params += _init_linear(keys[1], latent_dim * 4, latent_dim)
    # encoder heads
    params += _init_linear(keys[2], latent_dim, latent_dim)       # mean_out
    params += _init_linear(keys[3], latent_dim, latent_dim)       # log_var_out
    # decoder
    params += _init_linear(keys[4], latent_dim + z_dim, 8 * latent_dim)
    params += _init_linear(keys[5], 8 * latent_dim, 8 * latent_dim)
    params += _init_linear(keys[6], 8 * latent_dim, 2 * latent_dim)
    params += _init_linear(keys[7], 2 * latent_dim, 1)
    return tuple(params)


def cvae_forward(x, eps, params, z_dim=Z_DIM, latent_dim=LATENT_DIM,
                 batch_tile=8192, compute_dtype=jnp.float32):
    """Returns (decoder_out [B,1], z_mean [B,L], z_log_var [B,L]).

    compute_dtype=jnp.bfloat16 is the v6e/v7x fast path (bf16 weights and
    activation chain, f32 MXU accumulation and f32 outputs).  Keep the default
    float32 on v5e.
    """
    (e1w, e1b, e2w, e2b, emw, emb, evw, evb,
     d1w, d1b, d2w, d2b, d3w, d3b, d4w, d4b) = params
    B = x.shape[0]
    L = latent_dim
    feat = z_dim + 1
    cdt = jnp.dtype(compute_dtype)

    eps_row = _round_up(feat, 8)
    xe_rows = eps_row + L
    lv_row = _round_up(L, 8)
    head_rows = _round_up(lv_row + L, 8)
    out_rows = head_rows + 8

    # ---- weight prep (tiny, folds into the jit) ----
    wdt = cdt
    f32 = jnp.float32
    e1w_p = jnp.zeros((4 * L, xe_rows), wdt).at[:, :feat].set(e1w.astype(wdt))
    hdw = (jnp.zeros((head_rows, L), wdt)
           .at[:L].set(emw.astype(wdt))
           .at[lv_row:lv_row + L].set(evw.astype(wdt)))
    hdb = (jnp.zeros((head_rows, 1), f32)
           .at[:L].set(emb.astype(f32))
           .at[lv_row:lv_row + L].set(evb.astype(f32)))
    d1wz = d1w[:, :L].astype(wdt)
    d1wx = (jnp.zeros((8 * L, xe_rows), wdt)
            .at[:, feat - z_dim:feat].set(d1w[:, L:].astype(wdt)))
    d4w_p = jnp.zeros((8, 2 * L), wdt).at[0:1].set(d4w.astype(wdt))
    d4b_p = jnp.zeros((8, 1), f32).at[0:1].set(d4b.astype(f32))

    weights = (e1w_p, e1b.astype(f32), e2w.astype(wdt), e2b.astype(f32),
               hdw, hdb,
               d1wz, d1wx, d1b.astype(f32),
               d2w.astype(wdt), d2b.astype(f32),
               d3w.astype(wdt), d3b.astype(f32),
               d4w_p, d4b_p)

    # ---- batch tiling: pad to 128, tile divides Bp, prefer >= 2 grid steps ----
    tb, Bp = _choose_tile(B, batch_tile)

    # Packed feature-major input [x rows | pad-to-8 | eps rows], lanes = batch.
    x_fm = jnp.pad(x.T.astype(cdt), ((0, eps_row - feat), (0, Bp - B)))
    eps_fm = jnp.pad(eps.T.astype(cdt), ((0, 0), (0, Bp - B)))
    xe = jnp.concatenate([x_fm, eps_fm], axis=0)                    # [xe_rows, Bp]

    kernel = functools.partial(_cvae_kernel, z_dim=z_dim, latent_dim=latent_dim)

    def batch_spec(nrows):
        return pl.BlockSpec((nrows, tb), lambda i: (0, i))

    def full_spec(arr):
        # Weight / bias stays VMEM-resident across all grid steps.
        return pl.BlockSpec(arr.shape, lambda i: (0, 0))

    itemsize = cdt.itemsize
    # Streamed blocks are double-buffered; ~320 rows of live activations.
    est_vmem = tb * (2 * _round_up(xe_rows, 8) * itemsize
                     + 2 * out_rows * 4
                     + 320 * itemsize)
    vmem_limit = int(min(48 * 1024 * 1024, max(2 * est_vmem, 16 * 1024 * 1024)))

    flops = 2 * B * (4 * L * xe_rows + 4 * L * L + head_rows * L
                     + 8 * L * L + 8 * L * xe_rows + 64 * L * L
                     + 16 * L * L + 8 * 2 * L)
    transcendentals = B * 20 * L            # tanh + exp + 3x tanh-sigmoid
    bytes_accessed = int(Bp * (xe_rows * itemsize + out_rows * 4)
                         + sum(int(w.size) * w.dtype.itemsize for w in weights))

    packed = pl.pallas_call(
        kernel,
        out_shape=jax.ShapeDtypeStruct((out_rows, Bp), jnp.float32),
        grid=(Bp // tb,),
        in_specs=[batch_spec(xe_rows)] + [full_spec(w) for w in weights],
        out_specs=batch_spec(out_rows),
        compiler_params=pltpu.CompilerParams(
            dimension_semantics=("parallel",),
            vmem_limit_bytes=vmem_limit),
        cost_estimate=pl.CostEstimate(flops=flops,
                                      transcendentals=transcendentals,
                                      bytes_accessed=bytes_accessed),
    )(xe, *weights)

    z_mean = packed[:L, :B].T
    z_log_var = packed[lv_row:lv_row + L, :B].T
    y = packed[head_rows:head_rows + 1, :B].T
    return y, z_mean, z_log_var


def cvae_forward_ref(x, eps, params, z_dim=Z_DIM, latent_dim=LATENT_DIM):
    """Pure-JAX reference of the same forward pass (for correctness check)."""
    (e1w, e1b, e2w, e2b, emw, emb, evw, evb,
     d1w, d1b, d2w, d2b, d3w, d3b, d4w, d4b) = params
    h = jnp.maximum(x @ e1w.T + e1b[:, 0], 0.0)
    latent = jnp.tanh(h @ e2w.T + e2b[:, 0])
    z_mean = latent @ emw.T + emb[:, 0]
    z_log_var = latent @ evw.T + evb[:, 0]
    z = z_mean + eps * jnp.exp(z_log_var / 2.0)
    dec_in = jnp.concatenate([z, x[:, -z_dim:]], axis=1)
    h = jax.nn.sigmoid(dec_in @ d1w.T + d1b[:, 0])
    h = jax.nn.sigmoid(h @ d2w.T + d2b[:, 0])
    h = jax.nn.sigmoid(h @ d3w.T + d3b[:, 0])
    y = h @ d4w.T + d4b[:, 0]
    return y, z_mean, z_log_var


if __name__ == "__main__":
    key = jax.random.PRNGKey(0)
    k_params, k_x, k_eps = jax.random.split(key, 3)

    B = 8
    params = init_cvae_params(k_params, Z_DIM, LATENT_DIM)
    x = jax.random.normal(k_x, (B, Z_DIM + 1), jnp.float32)       # [batch, z_dim + 1]
    eps = jax.random.normal(k_eps, (B, LATENT_DIM), jnp.float32)  # reparam noise

    out, z_mean, z_log_var = cvae_forward(x, eps, params)
    jax.block_until_ready((out, z_mean, z_log_var))

    ref_out, ref_mean, ref_logvar = cvae_forward_ref(x, eps, params)
    assert out.shape == (B, 1) and z_mean.shape == (B, LATENT_DIM)
    assert jnp.allclose(out, ref_out, atol=1e-5, rtol=1e-5)
    assert jnp.allclose(z_mean, ref_mean, atol=1e-5, rtol=1e-5)
    assert jnp.allclose(z_log_var, ref_logvar, atol=1e-5, rtol=1e-5)

    # Multi-tile path (exercises >1 grid step + batch padding that divides Bp).
    B2 = 300
    k_x2, k_e2 = jax.random.split(jax.random.PRNGKey(1))
    x2 = jax.random.normal(k_x2, (B2, Z_DIM + 1), jnp.float32)
    eps2 = jax.random.normal(k_e2, (B2, LATENT_DIM), jnp.float32)
    out2, m2, lv2 = cvae_forward(x2, eps2, params)
    jax.block_until_ready((out2, m2, lv2))
    r_out2, r_m2, r_lv2 = cvae_forward_ref(x2, eps2, params)
    assert jnp.allclose(out2, r_out2, atol=1e-5, rtol=1e-5)
    assert jnp.allclose(m2, r_m2, atol=1e-5, rtol=1e-5)
    assert jnp.allclose(lv2, r_lv2, atol=1e-5, rtol=1e-5)

    # bf16 activation/weight path (v6e/v7x perf mode) — loose tolerance.
    out_bf, m_bf, lv_bf = cvae_forward(x, eps, params, compute_dtype=jnp.bfloat16)
    jax.block_until_ready((out_bf, m_bf, lv_bf))
    assert jnp.all(jnp.isfinite(out_bf))
    assert jnp.allclose(out_bf, ref_out, atol=0.1, rtol=0.1)
    assert jnp.allclose(m_bf, ref_mean, atol=0.1, rtol=0.1)

    print("KERNEL_OK")
</pallas_src>

<mosaic_0001>
module attributes {stable_mosaic.version = 11 : i64} {
  func.func @_cvae_kernel(%arg0: i32, %arg1: memref<18x128xf32, #tpu.memory_space<vmem>>, %arg2: memref<40x18xf32, #tpu.memory_space<vmem>>, %arg3: memref<40x1xf32, #tpu.memory_space<vmem>>, %arg4: memref<10x40xf32, #tpu.memory_space<vmem>>, %arg5: memref<10x1xf32, #tpu.memory_space<vmem>>, %arg6: memref<32x10xf32, #tpu.memory_space<vmem>>, %arg7: memref<32x1xf32, #tpu.memory_space<vmem>>, %arg8: memref<80x10xf32, #tpu.memory_space<vmem>>, %arg9: memref<80x18xf32, #tpu.memory_space<vmem>>, %arg10: memref<80x1xf32, #tpu.memory_space<vmem>>, %arg11: memref<80x80xf32, #tpu.memory_space<vmem>>, %arg12: memref<80x1xf32, #tpu.memory_space<vmem>>, %arg13: memref<20x80xf32, #tpu.memory_space<vmem>>, %arg14: memref<20x1xf32, #tpu.memory_space<vmem>>, %arg15: memref<8x20xf32, #tpu.memory_space<vmem>>, %arg16: memref<8x1xf32, #tpu.memory_space<vmem>>, %arg17: memref<40x128xf32, #tpu.memory_space<vmem>>) attributes {dimension_semantics = [#tpu.dimension_semantics<parallel>], iteration_bounds = array<i64: 1>, scalar_prefetch = 0 : i64, scratch_operands = 0 : i64, tpu.core_type = #tpu.core_type<tc>, window_params = [{transform_indices = @transform_0, window_bounds = array<i64: 18, 128>}, {pipeline_mode = #tpu.pipeline_mode<synchronous>, transform_indices = @transform_1, window_bounds = array<i64: 40, 18>}, {pipeline_mode = #tpu.pipeline_mode<synchronous>, transform_indices = @transform_2, window_bounds = array<i64: 40, 1>}, {pipeline_mode = #tpu.pipeline_mode<synchronous>, transform_indices = @transform_3, window_bounds = array<i64: 10, 40>}, {pipeline_mode = #tpu.pipeline_mode<synchronous>, transform_indices = @transform_4, window_bounds = array<i64: 10, 1>}, {pipeline_mode = #tpu.pipeline_mode<synchronous>, transform_indices = @transform_5, window_bounds = array<i64: 32, 10>}, {pipeline_mode = #tpu.pipeline_mode<synchronous>, transform_indices = @transform_6, window_bounds = array<i64: 32, 1>}, {pipeline_mode = #tpu.pipeline_mode<synchronous>, transform_indices = @transform_7, window_bounds = array<i64: 80, 10>}, {pipeline_mode = #tpu.pipeline_mode<synchronous>, transform_indices = @transform_8, window_bounds = array<i64: 80, 18>}, {pipeline_mode = #tpu.pipeline_mode<synchronous>, transform_indices = @transform_9, window_bounds = array<i64: 80, 1>}, {pipeline_mode = #tpu.pipeline_mode<synchronous>, transform_indices = @transform_10, window_bounds = array<i64: 80, 80>}, {pipeline_mode = #tpu.pipeline_mode<synchronous>, transform_indices = @transform_11, window_bounds = array<i64: 80, 1>}, {pipeline_mode = #tpu.pipeline_mode<synchronous>, transform_indices = @transform_12, window_bounds = array<i64: 20, 80>}, {pipeline_mode = #tpu.pipeline_mode<synchronous>, transform_indices = @transform_13, window_bounds = array<i64: 20, 1>}, {pipeline_mode = #tpu.pipeline_mode<synchronous>, transform_indices = @transform_14, window_bounds = array<i64: 8, 20>}, {pipeline_mode = #tpu.pipeline_mode<synchronous>, transform_indices = @transform_15, window_bounds = array<i64: 8, 1>}, {transform_indices = @transform_16, window_bounds = array<i64: 40, 128>}]} {
    %c0 = arith.constant 0 : index
    %c0_0 = arith.constant 0 : index
    %0 = vector.load %arg1[%c0, %c0_0] : memref<18x128xf32, #tpu.memory_space<vmem>>, vector<18x128xf32>
    %1 = vector.extract_strided_slice %0 {offsets = [8, 0], sizes = [10, 128], strides = [1, 1]} : vector<18x128xf32> to vector<10x128xf32>
    %c0_1 = arith.constant 0 : index
    %c0_2 = arith.constant 0 : index
    %2 = vector.load %arg2[%c0_1, %c0_2] : memref<40x18xf32, #tpu.memory_space<vmem>>, vector<40x18xf32>
    %cst = arith.constant dense<0.000000e+00> : vector<40x128xf32>
    %3 = tpu.matmul %2, %0, %cst {dimension_numbers = #tpu.dot_dimension_numbers<[1], [0], [0], [1], [0, 0, 1, 1], [], []>} : vector<40x18xf32>, vector<18x128xf32>, vector<40x128xf32> -> vector<40x128xf32>
    %c0_3 = arith.constant 0 : index
    %c0_4 = arith.constant 0 : index
    %4 = vector.load %arg3[%c0_3, %c0_4] : memref<40x1xf32, #tpu.memory_space<vmem>>, vector<40x1xf32>
    %5 = vector.broadcast %4 : vector<40x1xf32> to vector<40x128xf32>
    %6 = arith.addf %3, %5 : vector<40x128xf32>
    %cst_5 = arith.constant 0.000000e+00 : f32
    %7 = vector.broadcast %cst_5 : f32 to vector<40x128xf32>
    %8 = arith.maximumf %6, %7 : vector<40x128xf32>
    %c0_6 = arith.constant 0 : index
    %c0_7 = arith.constant 0 : index
    %9 = vector.load %arg4[%c0_6, %c0_7] : memref<10x40xf32, #tpu.memory_space<vmem>>, vector<10x40xf32>
    %cst_8 = arith.constant dense<0.000000e+00> : vector<10x128xf32>
    %10 = tpu.matmul %9, %8, %cst_8 {dimension_numbers = #tpu.dot_dimension_numbers<[1], [0], [0], [1], [0, 0, 1, 1], [], []>} : vector<10x40xf32>, vector<40x128xf32>, vector<10x128xf32> -> vector<10x128xf32>
    %c0_9 = arith.constant 0 : index
    %c0_10 = arith.constant 0 : index
    %11 = vector.load %arg5[%c0_9, %c0_10] : memref<10x1xf32, #tpu.memory_space<vmem>>, vector<10x1xf32>
    %12 = vector.broadcast %11 : vector<10x1xf32> to vector<10x128xf32>
    %13 = arith.addf %10, %12 : vector<10x128xf32>
    %14 = math.tanh %13 : vector<10x128xf32>
    %c0_11 = arith.constant 0 : index
    %c0_12 = arith.constant 0 : index
    %15 = vector.load %arg6[%c0_11, %c0_12] : memref<32x10xf32, #tpu.memory_space<vmem>>, vector<32x10xf32>
    %cst_13 = arith.constant dense<0.000000e+00> : vector<32x128xf32>
    %16 = tpu.matmul %15, %14, %cst_13 {dimension_numbers = #tpu.dot_dimension_numbers<[1], [0], [0], [1], [0, 0, 1, 1], [], []>} : vector<32x10xf32>, vector<10x128xf32>, vector<32x128xf32> -> vector<32x128xf32>
    %c0_14 = arith.constant 0 : index
    %c0_15 = arith.constant 0 : index
    %17 = vector.load %arg7[%c0_14, %c0_15] : memref<32x1xf32, #tpu.memory_space<vmem>>, vector<32x1xf32>
    %18 = vector.broadcast %17 : vector<32x1xf32> to vector<32x128xf32>
    %19 = arith.addf %16, %18 : vector<32x128xf32>
    %20 = vector.extract_strided_slice %19 {offsets = [0, 0], sizes = [10, 128], strides = [1, 1]} : vector<32x128xf32> to vector<10x128xf32>
    %21 = vector.extract_strided_slice %19 {offsets = [16, 0], sizes = [10, 128], strides = [1, 1]} : vector<32x128xf32> to vector<10x128xf32>
    %cst_16 = arith.constant 5.000000e-01 : f32
    %22 = vector.broadcast %cst_16 : f32 to vector<10x128xf32>
    %23 = arith.mulf %21, %22 : vector<10x128xf32>
    %24 = math.exp %23 : vector<10x128xf32>
    %25 = arith.mulf %1, %24 : vector<10x128xf32>
    %26 = arith.addf %20, %25 : vector<10x128xf32>
    %c0_17 = arith.constant 0 : index
    %c0_18 = arith.constant 0 : index
    %27 = vector.load %arg8[%c0_17, %c0_18] : memref<80x10xf32, #tpu.memory_space<vmem>>, vector<80x10xf32>
    %cst_19 = arith.constant dense<0.000000e+00> : vector<80x128xf32>
    %28 = tpu.matmul %27, %26, %cst_19 {dimension_numbers = #tpu.dot_dimension_numbers<[1], [0], [0], [1], [0, 0, 1, 1], [], []>} : vector<80x10xf32>, vector<10x128xf32>, vector<80x128xf32> -> vector<80x128xf32>
    %c0_20 = arith.constant 0 : index
    %c0_21 = arith.constant 0 : index
    %29 = vector.load %arg9[%c0_20, %c0_21] : memref<80x18xf32, #tpu.memory_space<vmem>>, vector<80x18xf32>
    %cst_22 = arith.constant dense<0.000000e+00> : vector<80x128xf32>
    %30 = tpu.matmul %29, %0, %cst_22 {dimension_numbers = #tpu.dot_dimension_numbers<[1], [0], [0], [1], [0, 0, 1, 1], [], []>} : vector<80x18xf32>, vector<18x128xf32>, vector<80x128xf32> -> vector<80x128xf32>
    %31 = arith.addf %28, %30 : vector<80x128xf32>
    %c0_23 = arith.constant 0 : index
    %c0_24 = arith.constant 0 : index
    %32 = vector.load %arg10[%c0_23, %c0_24] : memref<80x1xf32, #tpu.memory_space<vmem>>, vector<80x1xf32>
    %33 = vector.broadcast %32 : vector<80x1xf32> to vector<80x128xf32>
    %34 = arith.addf %31, %33 : vector<80x128xf32>
    %cst_25 = arith.constant 5.000000e-01 : f32
    %35 = vector.broadcast %cst_25 : f32 to vector<80x128xf32>
    %36 = arith.mulf %35, %34 : vector<80x128xf32>
    %37 = math.tanh %36 : vector<80x128xf32>
    %cst_26 = arith.constant 5.000000e-01 : f32
    %38 = vector.broadcast %cst_26 : f32 to vector<80x128xf32>
    %39 = arith.mulf %38, %37 : vector<80x128xf32>
    %cst_27 = arith.constant 5.000000e-01 : f32
    %40 = vector.broadcast %cst_27 : f32 to vector<80x128xf32>
    %41 = arith.addf %39, %40 : vector<80x128xf32>
    %c0_28 = arith.constant 0 : index
    %c0_29 = arith.constant 0 : index
    %42 = vector.load %arg11[%c0_28, %c0_29] : memref<80x80xf32, #tpu.memory_space<vmem>>, vector<80x80xf32>
    %cst_30 = arith.constant dense<0.000000e+00> : vector<80x128xf32>
    %43 = tpu.matmul %42, %41, %cst_30 {dimension_numbers = #tpu.dot_dimension_numbers<[1], [0], [0], [1], [0, 0, 1, 1], [], []>} : vector<80x80xf32>, vector<80x128xf32>, vector<80x128xf32> -> vector<80x128xf32>
    %c0_31 = arith.constant 0 : index
    %c0_32 = arith.constant 0 : index
    %44 = vector.load %arg12[%c0_31, %c0_32] : memref<80x1xf32, #tpu.memory_space<vmem>>, vector<80x1xf32>
    %45 = vector.broadcast %44 : vector<80x1xf32> to vector<80x128xf32>
    %46 = arith.addf %43, %45 : vector<80x128xf32>
    %cst_33 = arith.constant 5.000000e-01 : f32
    %47 = vector.broadcast %cst_33 : f32 to vector<80x128xf32>
    %48 = arith.mulf %47, %46 : vector<80x128xf32>
    %49 = math.tanh %48 : vector<80x128xf32>
    %cst_34 = arith.constant 5.000000e-01 : f32
    %50 = vector.broadcast %cst_34 : f32 to vector<80x128xf32>
    %51 = arith.mulf %50, %49 : vector<80x128xf32>
    %cst_35 = arith.constant 5.000000e-01 : f32
    %52 = vector.broadcast %cst_35 : f32 to vector<80x128xf32>
    %53 = arith.addf %51, %52 : vector<80x128xf32>
    %c0_36 = arith.constant 0 : index
    %c0_37 = arith.constant 0 : index
    %54 = vector.load %arg13[%c0_36, %c0_37] : memref<20x80xf32, #tpu.memory_space<vmem>>, vector<20x80xf32>
    %cst_38 = arith.constant dense<0.000000e+00> : vector<20x128xf32>
    %55 = tpu.matmul %54, %53, %cst_38 {dimension_numbers = #tpu.dot_dimension_numbers<[1], [0], [0], [1], [0, 0, 1, 1], [], []>} : vector<20x80xf32>, vector<80x128xf32>, vector<20x128xf32> -> vector<20x128xf32>
    %c0_39 = arith.constant 0 : index
    %c0_40 = arith.constant 0 : index
    %56 = vector.load %arg14[%c0_39, %c0_40] : memref<20x1xf32, #tpu.memory_space<vmem>>, vector<20x1xf32>
    %57 = vector.broadcast %56 : vector<20x1xf32> to vector<20x128xf32>
    %58 = arith.addf %55, %57 : vector<20x128xf32>
    %cst_41 = arith.constant 5.000000e-01 : f32
    %59 = vector.broadcast %cst_41 : f32 to vector<20x128xf32>
    %60 = arith.mulf %59, %58 : vector<20x128xf32>
    %61 = math.tanh %60 : vector<20x128xf32>
    %cst_42 = arith.constant 5.000000e-01 : f32
    %62 = vector.broadcast %cst_42 : f32 to vector<20x128xf32>
    %63 = arith.mulf %62, %61 : vector<20x128xf32>
    %cst_43 = arith.constant 5.000000e-01 : f32
    %64 = vector.broadcast %cst_43 : f32 to vector<20x128xf32>
    %65 = arith.addf %63, %64 : vector<20x128xf32>
    %c0_44 = arith.constant 0 : index
    %c0_45 = arith.constant 0 : index
    %66 = vector.load %arg15[%c0_44, %c0_45] : memref<8x20xf32, #tpu.memory_space<vmem>>, vector<8x20xf32>
    %cst_46 = arith.constant dense<0.000000e+00> : vector<8x128xf32>
    %67 = tpu.matmul %66, %65, %cst_46 {dimension_numbers = #tpu.dot_dimension_numbers<[1], [0], [0], [1], [0, 0, 1, 1], [], []>} : vector<8x20xf32>, vector<20x128xf32>, vector<8x128xf32> -> vector<8x128xf32>
    %c0_47 = arith.constant 0 : index
    %c0_48 = arith.constant 0 : index
    %68 = vector.load %arg16[%c0_47, %c0_48] : memref<8x1xf32, #tpu.memory_space<vmem>>, vector<8x1xf32>
    %69 = vector.broadcast %68 : vector<8x1xf32> to vector<8x128xf32>
    %70 = arith.addf %67, %69 : vector<8x128xf32>
    %c0_49 = arith.constant 0 : index
    %c0_50 = arith.constant 0 : index
    %71 = vector.load %arg17[%c0_49, %c0_50] : memref<40x128xf32, #tpu.memory_space<vmem>>, vector<32x128xf32>
    tpu.vector_store %arg17[%c0_49, %c0_50], %19 {strides = array<i32>} : memref<40x128xf32, #tpu.memory_space<vmem>>, vector<32x128xf32>,
    %c32 = arith.constant 32 : index
    %c0_51 = arith.constant 0 : index
    %72 = vector.load %arg17[%c32, %c0_51] : memref<40x128xf32, #tpu.memory_space<vmem>>, vector<8x128xf32>
    tpu.vector_store %arg17[%c32, %c0_51], %70 {strides = array<i32>} : memref<40x128xf32, #tpu.memory_space<vmem>>, vector<8x128xf32>,
    return
  }
  func.func @transform_0(%arg0: i32) -> (i32, i32) {
    %c0_i32 = arith.constant 0 : i32
    %c0_i32_0 = arith.constant 0 : i32
    return %c0_i32, %arg0 : i32, i32
  }
  func.func @transform_1(%arg0: i32) -> (i32, i32) {
    %c0_i32 = arith.constant 0 : i32
    %c0_i32_0 = arith.constant 0 : i32
    %c0_i32_1 = arith.constant 0 : i32
    return %c0_i32, %c0_i32_0 : i32, i32
  }
  func.func @transform_2(%arg0: i32) -> (i32, i32) {
    %c0_i32 = arith.constant 0 : i32
    %c0_i32_0 = arith.constant 0 : i32
    %c0_i32_1 = arith.constant 0 : i32
    return %c0_i32, %c0_i32_0 : i32, i32
  }
  func.func @transform_3(%arg0: i32) -> (i32, i32) {
    %c0_i32 = arith.constant 0 : i32
    %c0_i32_0 = arith.constant 0 : i32
    %c0_i32_1 = arith.constant 0 : i32
    return %c0_i32, %c0_i32_0 : i32, i32
  }
  func.func @transform_4(%arg0: i32) -> (i32, i32) {
    %c0_i32 = arith.constant 0 : i32
    %c0_i32_0 = arith.constant 0 : i32
    %c0_i32_1 = arith.constant 0 : i32
    return %c0_i32, %c0_i32_0 : i32, i32
  }
  func.func @transform_5(%arg0: i32) -> (i32, i32) {
    %c0_i32 = arith.constant 0 : i32
    %c0_i32_0 = arith.constant 0 : i32
    %c0_i32_1 = arith.constant 0 : i32
    return %c0_i32, %c0_i32_0 : i32, i32
  }
  func.func @transform_6(%arg0: i32) -> (i32, i32) {
    %c0_i32 = arith.constant 0 : i32
    %c0_i32_0 = arith.constant 0 : i32
    %c0_i32_1 = arith.constant 0 : i32
    return %c0_i32, %c0_i32_0 : i32, i32
  }
  func.func @transform_7(%arg0: i32) -> (i32, i32) {
    %c0_i32 = arith.constant 0 : i32
    %c0_i32_0 = arith.constant 0 : i32
    %c0_i32_1 = arith.constant 0 : i32
    return %c0_i32, %c0_i32_0 : i32, i32
  }
  func.func @transform_8(%arg0: i32) -> (i32, i32) {
    %c0_i32 = arith.constant 0 : i32
    %c0_i32_0 = arith.constant 0 : i32
    %c0_i32_1 = arith.constant 0 : i32
    return %c0_i32, %c0_i32_0 : i32, i32
  }
  func.func @transform_9(%arg0: i32) -> (i32, i32) {
    %c0_i32 = arith.constant 0 : i32
    %c0_i32_0 = arith.constant 0 : i32
    %c0_i32_1 = arith.constant 0 : i32
    return %c0_i32, %c0_i32_0 : i32, i32
  }
  func.func @transform_10(%arg0: i32) -> (i32, i32) {
    %c0_i32 = arith.constant 0 : i32
    %c0_i32_0 = arith.constant 0 : i32
    %c0_i32_1 = arith.constant 0 : i32
    return %c0_i32, %c0_i32_0 : i32, i32
  }
  func.func @transform_11(%arg0: i32) -> (i32, i32) {
    %c0_i32 = arith.constant 0 : i32
    %c0_i32_0 = arith.constant 0 : i32
    %c0_i32_1 = arith.constant 0 : i32
    return %c0_i32, %c0_i32_0 : i32, i32
  }
  func.func @transform_12(%arg0: i32) -> (i32, i32) {
    %c0_i32 = arith.constant 0 : i32
    %c0_i32_0 = arith.constant 0 : i32
    %c0_i32_1 = arith.constant 0 : i32
    return %c0_i32, %c0_i32_0 : i32, i32
  }
  func.func @transform_13(%arg0: i32) -> (i32, i32) {
    %c0_i32 = arith.constant 0 : i32
    %c0_i32_0 = arith.constant 0 : i32
    %c0_i32_1 = arith.constant 0 : i32
    return %c0_i32, %c0_i32_0 : i32, i32
  }
  func.func @transform_14(%arg0: i32) -> (i32, i32) {
    %c0_i32 = arith.constant 0 : i32
    %c0_i32_0 = arith.constant 0 : i32
    %c0_i32_1 = arith.constant 0 : i32
    return %c0_i32, %c0_i32_0 : i32, i32
  }
  func.func @transform_15(%arg0: i32) -> (i32, i32) {
    %c0_i32 = arith.constant 0 : i32
    %c0_i32_0 = arith.constant 0 : i32
    %c0_i32_1 = arith.constant 0 : i32
    return %c0_i32, %c0_i32_0 : i32, i32
  }
  func.func @transform_16(%arg0: i32) -> (i32, i32) {
    %c0_i32 = arith.constant 0 : i32
    %c0_i32_0 = arith.constant 0 : i32
    return %c0_i32, %arg0 : i32, i32
  }
}

</mosaic_0001>

<llo_original>
// kernel: tpu_custom_call.1
$region0: #{tpu_custom_call.1}
  #allocation0 [shape = 'u32[]', space=smem, size = 0x4, offset = 0x4, fixed_abs, tag = 'smem constant byte address 0x4 - core index']
  #allocation1 [shape = 'u32[144,128]{1,0:T(1,128)}', space=vmem, size = 0x12000, scoped, tag = 'internal scratch']
  %s0 = inlined_call_operand.vmem [shape: f32[18,128], index: 0, kind: input, shape index: {}]
  %s1 = inlined_call_operand.vmem [shape: f32[40,18], index: 1, kind: input, shape index: {}]
  %s2 = inlined_call_operand.vmem [shape: f32[40,1], index: 2, kind: input, shape index: {}]
  %s3 = inlined_call_operand.vmem [shape: f32[10,40], index: 3, kind: input, shape index: {}]
  %s4 = inlined_call_operand.vmem [shape: f32[10,1], index: 4, kind: input, shape index: {}]
  %s5 = inlined_call_operand.vmem [shape: f32[32,10], index: 5, kind: input, shape index: {}]
  %s6 = inlined_call_operand.vmem [shape: f32[32,1], index: 6, kind: input, shape index: {}]
  %s7 = inlined_call_operand.vmem [shape: f32[80,10], index: 7, kind: input, shape index: {}]
  %s8 = inlined_call_operand.vmem [shape: f32[80,18], index: 8, kind: input, shape index: {}]
  %s9 = inlined_call_operand.vmem [shape: f32[80,1], index: 9, kind: input, shape index: {}]
  %s10 = inlined_call_operand.vmem [shape: f32[80,80], index: 10, kind: input, shape index: {}]
  %s11 = inlined_call_operand.vmem [shape: f32[80,1], index: 11, kind: input, shape index: {}]
  %s12 = inlined_call_operand.vmem [shape: f32[20,80], index: 12, kind: input, shape index: {}]
  %s13 = inlined_call_operand.vmem [shape: f32[20,1], index: 13, kind: input, shape index: {}]
  %s14 = inlined_call_operand.vmem [shape: f32[8,20], index: 14, kind: input, shape index: {}]
  %s15 = inlined_call_operand.vmem [shape: f32[8,1], index: 15, kind: input, shape index: {}]
  %s16 = inlined_call_operand.hbm [shape: f32[40,128], index: 16, kind: output, shape index: {}]
  %s17 = sld [smem:[#allocation0]]
  $region74: #{tpu_custom_call.1} parent=0
    _
  %s19 = ssub.s32 1, %s17
  %s20 = scalar_select 0, %s19, %s17
  $region1: #{tpu_custom_call.1} parent=0
    #allocation2 [shape = 'u8[20480]{0}', space=vmem, size = 0x5000, scoped, tag = 'output window, operand 0, single buffered']
    #allocation3 [shape = 's32[1]{0}', space=sflag, size = 0x4, scoped, tag = 'scoped memory for tpu_custom_call.1']
    %21 = vsyncpa [#allocation3], 0
    // Predicated region
    $region2: #{tpu_custom_call.1} parent=1 // pred_check
      _
    $region3: #{tpu_custom_call.1} parent=1 // pred_check_branch
      %23 = sbr.rel (0) target = $region5
    $region4: #{tpu_custom_call.1} parent=1 // pred_region
      _
    $region5: #{tpu_custom_call.1} parent=1 // pred_fallthru
      _
    // Predicated region
    $region6: #{tpu_custom_call.1} parent=1 // pred_check
      _
    $region7: #{tpu_custom_call.1} parent=1 // pred_check_branch
      %25 = sbr.rel (0) target = $region9
    $region8: #{tpu_custom_call.1} parent=1 // pred_region
      _
    $region9: #{tpu_custom_call.1} parent=1 // pred_fallthru
      _
    // Predicated region
    $region10: #{tpu_custom_call.1} parent=1 // pred_check
      _
    $region11: #{tpu_custom_call.1} parent=1 // pred_check_branch
      %27 = sbr.rel (0) target = $region13
    $region12: #{tpu_custom_call.1} parent=1 // pred_region
      _
    $region13: #{tpu_custom_call.1} parent=1 // pred_fallthru
      _
    // Predicated region
    $region14: #{tpu_custom_call.1} parent=1 // pred_check
      _
    $region15: #{tpu_custom_call.1} parent=1 // pred_check_branch
      %29 = sbr.rel (0) target = $region17
    $region16: #{tpu_custom_call.1} parent=1 // pred_region
      _
    $region17: #{tpu_custom_call.1} parent=1 // pred_fallthru
      _
    // Predicated region
    $region18: #{tpu_custom_call.1} parent=1 // pred_check
      _
    $region19: #{tpu_custom_call.1} parent=1 // pred_check_branch
      %31 = sbr.rel (0) target = $region21
    $region20: #{tpu_custom_call.1} parent=1 // pred_region
      _
    $region21: #{tpu_custom_call.1} parent=1 // pred_fallthru
      _
    // Predicated region
    $region22: #{tpu_custom_call.1} parent=1 // pred_check
      _
    $region23: #{tpu_custom_call.1} parent=1 // pred_check_branch
      %33 = sbr.rel (0) target = $region25
    $region24: #{tpu_custom_call.1} parent=1 // pred_region
      _
    $region25: #{tpu_custom_call.1} parent=1 // pred_fallthru
      _
    // Predicated region
    $region26: #{tpu_custom_call.1} parent=1 // pred_check
      _
    $region27: #{tpu_custom_call.1} parent=1 // pred_check_branch
      %35 = sbr.rel (0) target = $region29
    $region28: #{tpu_custom_call.1} parent=1 // pred_region
      _
    $region29: #{tpu_custom_call.1} parent=1 // pred_fallthru
      _
    // Predicated region
    $region30: #{tpu_custom_call.1} parent=1 // pred_check
      _
    $region31: #{tpu_custom_call.1} parent=1 // pred_check_branch
      %37 = sbr.rel (0) target = $region33
    $region32: #{tpu_custom_call.1} parent=1 // pred_region
      _
    $region33: #{tpu_custom_call.1} parent=1 // pred_fallthru
      _
    // Predicated region
    $region34: #{tpu_custom_call.1} parent=1 // pred_check
      _
    $region35: #{tpu_custom_call.1} parent=1 // pred_check_branch
      %39 = sbr.rel (0) target = $region37
    $region36: #{tpu_custom_call.1} parent=1 // pred_region
      _
    $region37: #{tpu_custom_call.1} parent=1 // pred_fallthru
      _
    // Predicated region
    $region38: #{tpu_custom_call.1} parent=1 // pred_check
      _
    $region39: #{tpu_custom_call.1} parent=1 // pred_check_branch
      %41 = sbr.rel (0) target = $region41
    $region40: #{tpu_custom_call.1} parent=1 // pred_region
      _
    $region41: #{tpu_custom_call.1} parent=1 // pred_fallthru
      _
    // Predicated region
    $region42: #{tpu_custom_call.1} parent=1 // pred_check
      _
    $region43: #{tpu_custom_call.1} parent=1 // pred_check_branch
      %43 = sbr.rel (0) target = $region45
    $region44: #{tpu_custom_call.1} parent=1 // pred_region
      _
    $region45: #{tpu_custom_call.1} parent=1 // pred_fallthru
      _
    // Predicated region
    $region46: #{tpu_custom_call.1} parent=1 // pred_check
      _
    $region47: #{tpu_custom_call.1} parent=1 // pred_check_branch
      %45 = sbr.rel (0) target = $region49
    $region48: #{tpu_custom_call.1} parent=1 // pred_region
      _
    $region49: #{tpu_custom_call.1} parent=1 // pred_fallthru
      _
    // Predicated region
    $region50: #{tpu_custom_call.1} parent=1 // pred_check
      _
    $region51: #{tpu_custom_call.1} parent=1 // pred_check_branch
      %47 = sbr.rel (0) target = $region53
    $region52: #{tpu_custom_call.1} parent=1 // pred_region
      _
    $region53: #{tpu_custom_call.1} parent=1 // pred_fallthru
      _
    // Predicated region
    $region54: #{tpu_custom_call.1} parent=1 // pred_check
      _
    $region55: #{tpu_custom_call.1} parent=1 // pred_check_branch
      %49 = sbr.rel (0) target = $region57
    $region56: #{tpu_custom_call.1} parent=1 // pred_region
      _
    $region57: #{tpu_custom_call.1} parent=1 // pred_fallthru
      _
    // Predicated region
    $region58: #{tpu_custom_call.1} parent=1 // pred_check
      _
    $region59: #{tpu_custom_call.1} parent=1 // pred_check_branch
      %51 = sbr.rel (0) target = $region61
    $region60: #{tpu_custom_call.1} parent=1 // pred_region
      _
    $region61: #{tpu_custom_call.1} parent=1 // pred_fallthru
      _
    // Predicated region
    $region62: #{tpu_custom_call.1} parent=1 // pred_check
      _
    $region63: #{tpu_custom_call.1} parent=1 // pred_check_branch
      %53 = sbr.rel (0) target = $region65
    $region64: #{tpu_custom_call.1} parent=1 // pred_region
      _
    $region65: #{tpu_custom_call.1} parent=1 // pred_fallthru
      _
    %v54 = vld [vmem:[%s0] sm:$0xff]
    %v55 = vld [vmem:[%s0 + $0x8] sm:$0xff]
    %v56 = vld [vmem:[%s0 + $0x10] sm:$0x3]
    %v57 = vld [vmem:[%s1] sm:$0xff]
    %v58 = vld [vmem:[%s1 + $0x8] sm:$0xff]
    %v59 = vld [vmem:[%s1 + $0x10] sm:$0xff]
    %v60 = vld [vmem:[%s1 + $0x18] sm:$0xff]
    %v61 = vld [vmem:[%s1 + $0x20] sm:$0xff]
    %v62 = vld [vmem:[%s2] sm:$0xff]
    %v63 = vld [vmem:[%s2 + $0x8] sm:$0xff]
    %v64 = vld [vmem:[%s2 + $0x10] sm:$0xff]
    %v65 = vld [vmem:[%s2 + $0x18] sm:$0xff]
    %v66 = vld [vmem:[%s2 + $0x20] sm:$0xff]
    %68 = vset.pattern.permute.xlu0 0
    %69 = vperm.xlu0 %68, %v62
    %v70 = vpop.permute.xlu0 %69
    %73 = vset.pattern.permute.xlu0 0
    %74 = vperm.xlu0 %73, %v63
    %v75 = vpop.permute.xlu0 %74
    %78 = vset.pattern.permute.xlu0 0
    %79 = vperm.xlu0 %78, %v64
    %v80 = vpop.permute.xlu0 %79
    %83 = vset.pattern.permute.xlu0 0
    %84 = vperm.xlu0 %83, %v65
    %v85 = vpop.permute.xlu0 %84
    %88 = vset.pattern.permute.xlu0 0
    %89 = vperm.xlu0 %88, %v66
    %v90 = vpop.permute.xlu0 %89
    %vm92 = vcmask 146432
    %v94 = vsel %vm92, %v57, 0
    %v97 = vsel %vm92, %v58, 0
    %v100 = vsel %vm92, %v59, 0
    %v103 = vsel %vm92, %v60, 0
    %v106 = vsel %vm92, %v61, 0
    %vm108 = vcmask 1041408
    %v110 = vsel %vm108, %v56, 0
    %112 = vmatprep.subr.mxu0 0.0
    %113 = vmatpush1.msra.mxu0 0.0
    %114 = vmatprep.subr.mxu0 0.0
    %115 = vmatpush1.msra.mxu0 0.0
    %116 = vmatprep.subr.mxu0 0.0
    %117 = vmatpush1.msra.mxu0 0.0
    %118 = vmatprep.subr.mxu0 0.0
    %119 = vmatpush1.msra.mxu0 0.0
    %120 = vmatprep.subr.mxu0 0.0
    %121 = vmatpush1.msra.mxu0 0.0
    %122 = vmatprep.subr.mxu0 0.0
    %123 = vmatpush1.msra.mxu0 0.0
    %124 = vmatprep.subr.mxu0 0.0
    %125 = vmatpush1.msra.mxu0 0.0
    %126 = vmatprep.subr.mxu0 0.0
    %127 = vmatpush1.msra.mxu0 0.0
    %128 = vmatprep.subr.mxu0 0.0
    %129 = vmatpush1.msra.mxu0 0.0
    %130 = vmatprep.subr.mxu0 0.0
    %131 = vmatpush1.msra.mxu0 0.0
    %132 = vmatprep.subr.mxu0 0.0
    %133 = vmatpush1.msra.mxu0 0.0
    %134 = vmatprep.subr.mxu0 0.0
    %135 = vmatpush1.msra.mxu0 0.0
    %136 = vmatprep.subr.mxu0 0.0
    %137 = vmatpush1.msra.mxu0 0.0
    %138 = vmatprep.subr.mxu0 0.0
    %139 = vmatpush1.msra.mxu0 %v110
    %140 = vmatprep.subr.mxu0 0.0
    %141 = vmatpush1.msra.mxu0 %v55
    %142 = vmatprep.subr.mxu0 0.0
    %143 = vmatpush1.msra.mxu0 %v54
    %144 = vmatprep.subr.mxu0 0.0
    %145 = vmatpush2.msra.mxu0 0.0
    %146 = vmatprep.subr.mxu0 0.0
    %147 = vmatpush2.msra.mxu0 0.0
    %148 = vmatprep.subr.mxu0 0.0
    %149 = vmatpush2.msra.mxu0 0.0
    %150 = vmatprep.subr.mxu0 0.0
    %151 = vmatpush2.msra.mxu0 0.0
    %152 = vmatprep.subr.mxu0 0.0
    %153 = vmatpush2.msra.mxu0 0.0
    %154 = vmatprep.subr.mxu0 0.0
    %155 = vmatpush2.msra.mxu0 0.0
    %156 = vmatprep.subr.mxu0 0.0
    %157 = vmatpush2.msra.mxu0 0.0
    %158 = vmatprep.subr.mxu0 0.0
    %159 = vmatpush2.msra.mxu0 0.0
    %160 = vmatprep.subr.mxu0 0.0
    %161 = vmatpush2.msra.mxu0 0.0
    %162 = vmatprep.subr.mxu0 0.0
    %163 = vmatpush2.msra.mxu0 0.0
    %164 = vmatprep.subr.mxu0 0.0
    %165 = vmatpush2.msra.mxu0 0.0
    %166 = vmatprep.subr.mxu0 0.0
    %167 = vmatpush2.msra.mxu0 0.0
    %168 = vmatprep.subr.mxu0 0.0
    %169 = vmatpush2.msra.mxu0 0.0
    %170 = vmatprep.subr.mxu0 0.0
    %171 = vmatpush2.msra.mxu0 0.0
    %172 = vmatprep.subr.mxu0 0.0
    %173 = vmatpush2.msra.mxu0 0.0
    %174 = vmatprep.subr.mxu0 0.0
    %175 = vmatpush2.msra.mxu0 0.0
    %176 = vmatprep.mubr.f32.mxu0 0.0
    %177 = vmatmul.mubr.f32.gmra.mxu0 %v94
    %v178 = vpop.f32.mrf.mxu0
    %v179 = vadd.f32 %v70, %v178
    %v180 = vpop.f32.mrf.mxu0
    %181 = vmatprep.mubr.f32.mxu0 0.0
    %182 = vmatmul.mubr.f32.gmra.mxu0 %v97
    %v183 = vpop.f32.mrf.mxu0
    %v184 = vadd.f32 %v75, %v183
    %v185 = vpop.f32.mrf.mxu0
    %186 = vmatprep.mubr.f32.mxu0 0.0
    %187 = vmatmul.mubr.f32.gmra.mxu0 %v100
    %v188 = vpop.f32.mrf.mxu0
    %v189 = vadd.f32 %v80, %v188
    %v190 = vpop.f32.mrf.mxu0
    %191 = vmatprep.mubr.f32.mxu0 0.0
    %192 = vmatmul.mubr.f32.gmra.mxu0 %v103
    %v193 = vpop.f32.mrf.mxu0
    %v194 = vadd.f32 %v85, %v193
    %v195 = vpop.f32.mrf.mxu0
    %196 = vmatprep.mubr.f32.mxu0 0.0
    %197 = vmatmul.mubr.f32.gmra.mxu0 %v106
    %v198 = vpop.f32.mrf.mxu0
    %v199 = vadd.f32 %v90, %v198
    %v200 = vpop.f32.mrf.mxu0
    %201 = vdwg.mxu0
    %v202 = vmax.f32 %v179, 0.0
    %v203 = vmax.f32 %v184, 0.0
    %v204 = vmax.f32 %v189, 0.0
    %v205 = vmax.f32 %v194, 0.0
    %v206 = vmax.f32 %v199, 0.0
    %v207 = vld [vmem:[%s3] sm:$0xff]
    %v208 = vld [vmem:[%s3 + $0x8] sm:$0x3]
    %v209 = vld [vmem:[%s4] sm:$0xff]
    %v210 = vld [vmem:[%s4 + $0x8] sm:$0x3]
    %212 = vset.pattern.permute.xlu0 0
    %213 = vperm.xlu0 %212, %v209
    %v214 = vpop.permute.xlu0 %213
    %217 = vset.pattern.permute.xlu0 0
    %218 = vperm.xlu0 %217, %v210
    %v219 = vpop.permute.xlu0 %218
    %vm221 = vcmask 326656
    %v223 = vsel %vm221, %v207, 0
    %v226 = vsel %vm221, %v208, 0
    %228 = vmatprep.subr.mxu0 0.0
    %229 = vmatpush1.msra.mxu0 0.0
    %230 = vmatprep.subr.mxu0 0.0
    %231 = vmatpush1.msra.mxu0 0.0
    %232 = vmatprep.subr.mxu0 0.0
    %233 = vmatpush1.msra.mxu0 0.0
    %234 = vmatprep.subr.mxu0 0.0
    %235 = vmatpush1.msra.mxu0 0.0
    %236 = vmatprep.subr.mxu0 0.0
    %237 = vmatpush1.msra.mxu0 0.0
    %238 = vmatprep.subr.mxu0 0.0
    %239 = vmatpush1.msra.mxu0 0.0
    %240 = vmatprep.subr.mxu0 0.0
    %241 = vmatpush1.msra.mxu0 0.0
    %242 = vmatprep.subr.mxu0 0.0
    %243 = vmatpush1.msra.mxu0 0.0
    %244 = vmatprep.subr.mxu0 0.0
    %245 = vmatpush1.msra.mxu0 0.0
    %246 = vmatprep.subr.mxu0 0.0
    %247 = vmatpush1.msra.mxu0 0.0
    %248 = vmatprep.subr.mxu0 0.0
    %249 = vmatpush1.msra.mxu0 0.0
    %250 = vmatprep.subr.mxu0 0.0
    %251 = vmatpush1.msra.mxu0 %v206
    %252 = vmatprep.subr.mxu0 0.0
    %253 = vmatpush1.msra.mxu0 %v205
    %254 = vmatprep.subr.mxu0 0.0
    %255 = vmatpush1.msra.mxu0 %v204
    %256 = vmatprep.subr.mxu0 0.0
    %257 = vmatpush1.msra.mxu0 %v203
    %258 = vmatprep.subr.mxu0 0.0
    %259 = vmatpush1.msra.mxu0 %v202
    %260 = vmatprep.subr.mxu0 0.0
    %261 = vmatpush2.msra.mxu0 0.0
    %262 = vmatprep.subr.mxu0 0.0
    %263 = vmatpush2.msra.mxu0 0.0
    %264 = vmatprep.subr.mxu0 0.0
    %265 = vmatpush2.msra.mxu0 0.0
    %266 = vmatprep.subr.mxu0 0.0
    %267 = vmatpush2.msra.mxu0 0.0
    %268 = vmatprep.subr.mxu0 0.0
    %269 = vmatpush2.msra.mxu0 0.0
    %270 = vmatprep.subr.mxu0 0.0
    %271 = vmatpush2.msra.mxu0 0.0
    %272 = vmatprep.subr.mxu0 0.0
    %273 = vmatpush2.msra.mxu0 0.0
    %274 = vmatprep.subr.mxu0 0.0
    %275 = vmatpush2.msra.mxu0 0.0
    %276 = vmatprep.subr.mxu0 0.0
    %277 = vmatpush2.msra.mxu0 0.0
    %278 = vmatprep.subr.mxu0 0.0
    %279 = vmatpush2.msra.mxu0 0.0
    %280 = vmatprep.subr.mxu0 0.0
    %281 = vmatpush2.msra.mxu0 0.0
    %282 = vmatprep.subr.mxu0 0.0
    %283 = vmatpush2.msra.mxu0 0.0
    %284 = vmatprep.subr.mxu0 0.0
    %285 = vmatpush2.msra.mxu0 0.0
    %286 = vmatprep.subr.mxu0 0.0
    %287 = vmatpush2.msra.mxu0 0.0
    %288 = vmatprep.subr.mxu0 0.0
    %289 = vmatpush2.msra.mxu0 0.0
    %290 = vmatprep.subr.mxu0 0.0
    %291 = vmatpush2.msra.mxu0 0.0
    %292 = vmatprep.mubr.f32.mxu0 0.0
    %293 = vmatmul.mubr.f32.gmra.mxu0 %v223
    %v294 = vpop.f32.mrf.mxu0
    %v295 = vadd.f32 %v214, %v294
    %v296 = vpop.f32.mrf.mxu0
    %297 = vmatprep.mubr.f32.mxu0 0.0
    %298 = vmatmul.mubr.f32.gmra.mxu0 %v226
    %v299 = vpop.f32.mrf.mxu0
    %v300 = vadd.f32 %v219, %v299
    %v301 = vpop.f32.mrf.mxu0
    %302 = vdwg.mxu0
    %v303 = vtanh.pop %v295
    %v304 = vtanh.pop %v300
    %v305 = vld [vmem:[%s5] sm:$0xff]
    %v306 = vld [vmem:[%s5 + $0x8] sm:$0xff]
    %v307 = vld [vmem:[%s5 + $0x10] sm:$0xff]
    %v308 = vld [vmem:[%s5 + $0x18] sm:$0xff]
    %v309 = vld [vmem:[%s6] sm:$0xff]
    %v310 = vld [vmem:[%s6 + $0x8] sm:$0xff]
    %v311 = vld [vmem:[%s6 + $0x10] sm:$0xff]
    %v312 = vld [vmem:[%s6 + $0x18] sm:$0xff]
    %314 = vset.pattern.permute.xlu0 0
    %315 = vperm.xlu0 %314, %v309
    %v316 = vpop.permute.xlu0 %315
    %319 = vset.pattern.permute.xlu0 0
    %320 = vperm.xlu0 %319, %v310
    %v321 = vpop.permute.xlu0 %320
    %324 = vset.pattern.permute.xlu0 0
    %325 = vperm.xlu0 %324, %v311
    %v326 = vpop.permute.xlu0 %325
    %329 = vset.pattern.permute.xlu0 0
    %330 = vperm.xlu0 %329, %v312
    %v331 = vpop.permute.xlu0 %330
    %vm333 = vcmask 80896
    %v335 = vsel %vm333, %v305, 0
    %v338 = vsel %vm333, %v306, 0
    %v341 = vsel %vm333, %v307, 0
    %v344 = vsel %vm333, %v308, 0
    %v347 = vsel %vm108, %v304, 0
    %349 = vmatprep.subr.mxu0 0.0
    %350 = vmatpush1.msra.mxu0 0.0
    %351 = vmatprep.subr.mxu0 0.0
    %352 = vmatpush1.msra.mxu0 0.0
    %353 = vmatprep.subr.mxu0 0.0
    %354 = vmatpush1.msra.mxu0 0.0
    %355 = vmatprep.subr.mxu0 0.0
    %356 = vmatpush1.msra.mxu0 0.0
    %357 = vmatprep.subr.mxu0 0.0
    %358 = vmatpush1.msra.mxu0 0.0
    %359 = vmatprep.subr.mxu0 0.0
    %360 = vmatpush1.msra.mxu0 0.0
    %361 = vmatprep.subr.mxu0 0.0
    %362 = vmatpush1.msra.mxu0 0.0
    %363 = vmatprep.subr.mxu0 0.0
    %364 = vmatpush1.msra.mxu0 0.0
    %365 = vmatprep.subr.mxu0 0.0
    %366 = vmatpush1.msra.mxu0 0.0
    %367 = vmatprep.subr.mxu0 0.0
    %368 = vmatpush1.msra.mxu0 0.0
    %369 = vmatprep.subr.mxu0 0.0
    %370 = vmatpush1.msra.mxu0 0.0
    %371 = vmatprep.subr.mxu0 0.0
    %372 = vmatpush1.msra.mxu0 0.0
    %373 = vmatprep.subr.mxu0 0.0
    %374 = vmatpush1.msra.mxu0 0.0
    %375 = vmatprep.subr.mxu0 0.0
    %376 = vmatpush1.msra.mxu0 0.0
    %377 = vmatprep.subr.mxu0 0.0
    %378 = vmatpush1.msra.mxu0 %v347
    %379 = vmatprep.subr.mxu0 0.0
    %380 = vmatpush1.msra.mxu0 %v303
    %381 = vmatprep.subr.mxu0 0.0
    %382 = vmatpush2.msra.mxu0 0.0
    %383 = vmatprep.subr.mxu0 0.0
    %384 = vmatpush2.msra.mxu0 0.0
    %385 = vmatprep.subr.mxu0 0.0
    %386 = vmatpush2.msra.mxu0 0.0
    %387 = vmatprep.subr.mxu0 0.0
    %388 = vmatpush2.msra.mxu0 0.0
    %389 = vmatprep.subr.mxu0 0.0
    %390 = vmatpush2.msra.mxu0 0.0
    %391 = vmatprep.subr.mxu0 0.0
    %392 = vmatpush2.msra.mxu0 0.0
    %393 = vmatprep.subr.mxu0 0.0
    %394 = vmatpush2.msra.mxu0 0.0
    %395 = vmatprep.subr.mxu0 0.0
    %396 = vmatpush2.msra.mxu0 0.0
    %397 = vmatprep.subr.mxu0 0.0
    %398 = vmatpush2.msra.mxu0 0.0
    %399 = vmatprep.subr.mxu0 0.0
    %400 = vmatpush2.msra.mxu0 0.0
    %401 = vmatprep.subr.mxu0 0.0
    %402 = vmatpush2.msra.mxu0 0.0
    %403 = vmatprep.subr.mxu0 0.0
    %404 = vmatpush2.msra.mxu0 0.0
    %405 = vmatprep.subr.mxu0 0.0
    %406 = vmatpush2.msra.mxu0 0.0
    %407 = vmatprep.subr.mxu0 0.0
    %408 = vmatpush2.msra.mxu0 0.0
    %409 = vmatprep.subr.mxu0 0.0
    %410 = vmatpush2.msra.mxu0 0.0
    %411 = vmatprep.subr.mxu0 0.0
    %412 = vmatpush2.msra.mxu0 0.0
    %413 = vmatprep.mubr.f32.mxu0 0.0
    %414 = vmatmul.mubr.f32.gmra.mxu0 %v335
    %v415 = vpop.f32.mrf.mxu0
    %v416 = vadd.f32 %v316, %v415
    %v417 = vpop.f32.mrf.mxu0
    %418 = vmatprep.mubr.f32.mxu0 0.0
    %419 = vmatmul.mubr.f32.gmra.mxu0 %v338
    %v420 = vpop.f32.mrf.mxu0
    %v421 = vadd.f32 %v321, %v420
    %v422 = vpop.f32.mrf.mxu0
    %423 = vmatprep.mubr.f32.mxu0 0.0
    %424 = vmatmul.mubr.f32.gmra.mxu0 %v341
    %v425 = vpop.f32.mrf.mxu0
    %v426 = vadd.f32 %v326, %v425
    %v427 = vpop.f32.mrf.mxu0
    %428 = vmatprep.mubr.f32.mxu0 0.0
    %429 = vmatmul.mubr.f32.gmra.mxu0 %v344
    %v430 = vpop.f32.mrf.mxu0
    %v431 = vadd.f32 %v331, %v430
    %v432 = vpop.f32.mrf.mxu0
    %433 = vdwg.mxu0
    %v434 = vmul.f32 %v426, 0.5
    %v435 = vmul.f32 %v431, 0.5
    %v436 = vmul.f32 %v434, 1.442695
    %v437 = vpow.pop %v436
    %v438 = vmul.f32 %v435, 1.442695
    %v439 = vpow.pop %v438
    %v440 = vmul.f32 %v55, %v437
    %v441 = vmul.f32 %v56, %v439
    %v442 = vadd.f32 %v416, %v440
    %v443 = vadd.f32 %v421, %v441
    %v444 = vld [vmem:[%s7] sm:$0xff]
    %v445 = vld [vmem:[%s7 + $0x8] sm:$0xff]
    %v446 = vld [vmem:[%s7 + $0x10] sm:$0xff]
    %v447 = vld [vmem:[%s7 + $0x18] sm:$0xff]
    %v448 = vld [vmem:[%s7 + $0x20] sm:$0xff]
    %v449 = vld [vmem:[%s7 + $0x28] sm:$0xff]
    %v450 = vld [vmem:[%s7 + $0x30] sm:$0xff]
    %v451 = vld [vmem:[%s7 + $0x38] sm:$0xff]
    %v452 = vld [vmem:[%s7 + $0x40] sm:$0xff]
    %v453 = vld [vmem:[%s7 + $0x48] sm:$0xff]
    %v454 = vld [vmem:[%s8] sm:$0xff]
    %v455 = vld [vmem:[%s8 + $0x8] sm:$0xff]
    %v456 = vld [vmem:[%s8 + $0x10] sm:$0xff]
    %v457 = vld [vmem:[%s8 + $0x18] sm:$0xff]
    %v458 = vld [vmem:[%s8 + $0x20] sm:$0xff]
    %v459 = vld [vmem:[%s8 + $0x28] sm:$0xff]
    %v460 = vld [vmem:[%s8 + $0x30] sm:$0xff]
    %v461 = vld [vmem:[%s8 + $0x38] sm:$0xff]
    %v462 = vld [vmem:[%s8 + $0x40] sm:$0xff]
    %v463 = vld [vmem:[%s8 + $0x48] sm:$0xff]
    %v465 = vsel %vm92, %v454, 0
    %v468 = vsel %vm92, %v455, 0
    %v471 = vsel %vm92, %v456, 0
    %v474 = vsel %vm92, %v457, 0
    %v477 = vsel %vm92, %v458, 0
    %v480 = vsel %vm92, %v459, 0
    %v483 = vsel %vm92, %v460, 0
    %v486 = vsel %vm92, %v461, 0
    %v489 = vsel %vm92, %v462, 0
    %v492 = vsel %vm92, %v463, 0
    %494 = vmatprep.subr.mxu0 0.0
    %495 = vmatpush1.msra.mxu0 0.0
    %496 = vmatprep.subr.mxu0 0.0
    %497 = vmatpush1.msra.mxu0 0.0
    %498 = vmatprep.subr.mxu0 0.0
    %499 = vmatpush1.msra.mxu0 0.0
    %500 = vmatprep.subr.mxu0 0.0
    %501 = vmatpush1.msra.mxu0 0.0
    %502 = vmatprep.subr.mxu0 0.0
    %503 = vmatpush1.msra.mxu0 0.0
    %504 = vmatprep.subr.mxu0 0.0
    %505 = vmatpush1.msra.mxu0 0.0
    %506 = vmatprep.subr.mxu0 0.0
    %507 = vmatpush1.msra.mxu0 0.0
    %508 = vmatprep.subr.mxu0 0.0
    %509 = vmatpush1.msra.mxu0 0.0
    %510 = vmatprep.subr.mxu0 0.0
    %511 = vmatpush1.msra.mxu0 0.0
    %512 = vmatprep.subr.mxu0 0.0
    %513 = vmatpush1.msra.mxu0 0.0
    %514 = vmatprep.subr.mxu0 0.0
    %515 = vmatpush1.msra.mxu0 0.0
    %516 = vmatprep.subr.mxu0 0.0
    %517 = vmatpush1.msra.mxu0 0.0
    %518 = vmatprep.subr.mxu0 0.0
    %519 = vmatpush1.msra.mxu0 0.0
    %520 = vmatprep.subr.mxu0 0.0
    %521 = vmatpush1.msra.mxu0 %v110
    %522 = vmatprep.subr.mxu0 0.0
    %523 = vmatpush1.msra.mxu0 %v55
    %524 = vmatprep.subr.mxu0 0.0
    %525 = vmatpush1.msra.mxu0 %v54
    %526 = vmatprep.subr.mxu0 0.0
    %527 = vmatpush2.msra.mxu0 0.0
    %528 = vmatprep.subr.mxu0 0.0
    %529 = vmatpush2.msra.mxu0 0.0
    %530 = vmatprep.subr.mxu0 0.0
    %531 = vmatpush2.msra.mxu0 0.0
    %532 = vmatprep.subr.mxu0 0.0
    %533 = vmatpush2.msra.mxu0 0.0
    %534 = vmatprep.subr.mxu0 0.0
    %535 = vmatpush2.msra.mxu0 0.0
    %536 = vmatprep.subr.mxu0 0.0
    %537 = vmatpush2.msra.mxu0 0.0
    %538 = vmatprep.subr.mxu0 0.0
    %539 = vmatpush2.msra.mxu0 0.0
    %540 = vmatprep.subr.mxu0 0.0
    %541 = vmatpush2.msra.mxu0 0.0
    %542 = vmatprep.subr.mxu0 0.0
    %543 = vmatpush2.msra.mxu0 0.0
    %544 = vmatprep.subr.mxu0 0.0
    %545 = vmatpush2.msra.mxu0 0.0
    %546 = vmatprep.subr.mxu0 0.0
    %547 = vmatpush2.msra.mxu0 0.0
    %548 = vmatprep.subr.mxu0 0.0
    %549 = vmatpush2.msra.mxu0 0.0
    %550 = vmatprep.subr.mxu0 0.0
    %551 = vmatpush2.msra.mxu0 0.0
    %552 = vmatprep.subr.mxu0 0.0
    %553 = vmatpush2.msra.mxu0 0.0
    %554 = vmatprep.subr.mxu0 0.0
    %555 = vmatpush2.msra.mxu0 0.0
    %556 = vmatprep.subr.mxu0 0.0
    %557 = vmatpush2.msra.mxu0 0.0
    %558 = vmatprep.mubr.f32.mxu0 0.0
    %559 = vmatmul.mubr.f32.gmra.mxu0 %v465
    %v560 = vpop.f32.mrf.mxu0
    %v561 = vadd.f32 0.0, %v560
    %v562 = vpop.f32.mrf.mxu0
    %563 = vmatprep.mubr.f32.mxu0 0.0
    %564 = vmatmul.mubr.f32.gmra.mxu0 %v468
    %v565 = vpop.f32.mrf.mxu0
    %v566 = vadd.f32 0.0, %v565
    %v567 = vpop.f32.mrf.mxu0
    %568 = vmatprep.mubr.f32.mxu0 0.0
    %569 = vmatmul.mubr.f32.gmra.mxu0 %v471
    %v570 = vpop.f32.mrf.mxu0
    %v571 = vadd.f32 0.0, %v570
    %v572 = vpop.f32.mrf.mxu0
    %573 = vmatprep.mubr.f32.mxu0 0.0
    %574 = vmatmul.mubr.f32.gmra.mxu0 %v474
    %v575 = vpop.f32.mrf.mxu0
    %v576 = vadd.f32 0.0, %v575
    %v577 = vpop.f32.mrf.mxu0
    %578 = vmatprep.mubr.f32.mxu0 0.0
    %579 = vmatmul.mubr.f32.gmra.mxu0 %v477
    %v580 = vpop.f32.mrf.mxu0
    %v581 = vadd.f32 0.0, %v580
    %v582 = vpop.f32.mrf.mxu0
    %583 = vmatprep.mubr.f32.mxu0 0.0
    %584 = vmatmul.mubr.f32.gmra.mxu0 %v480
    %v585 = vpop.f32.mrf.mxu0
    %v586 = vadd.f32 0.0, %v585
    %v587 = vpop.f32.mrf.mxu0
    %588 = vmatprep.mubr.f32.mxu0 0.0
    %589 = vmatmul.mubr.f32.gmra.mxu0 %v483
    %v590 = vpop.f32.mrf.mxu0
    %v591 = vadd.f32 0.0, %v590
    %v592 = vpop.f32.mrf.mxu0
    %593 = vmatprep.mubr.f32.mxu0 0.0
    %594 = vmatmul.mubr.f32.gmra.mxu0 %v486
    %v595 = vpop.f32.mrf.mxu0
    %v596 = vadd.f32 0.0, %v595
    %v597 = vpop.f32.mrf.mxu0
    %598 = vmatprep.mubr.f32.mxu0 0.0
    %599 = vmatmul.mubr.f32.gmra.mxu0 %v489
    %v600 = vpop.f32.mrf.mxu0
    %v601 = vadd.f32 0.0, %v600
    %v602 = vpop.f32.mrf.mxu0
    %603 = vmatprep.mubr.f32.mxu0 0.0
    %604 = vmatmul.mubr.f32.gmra.mxu0 %v492
    %v605 = vpop.f32.mrf.mxu0
    %v606 = vadd.f32 0.0, %v605
    %v607 = vpop.f32.mrf.mxu0
    %608 = vdwg.mxu0
    %v610 = vsel %vm333, %v444, 0
    %v613 = vsel %vm333, %v445, 0
    %v616 = vsel %vm333, %v446, 0
    %v619 = vsel %vm333, %v447, 0
    %v622 = vsel %vm333, %v448, 0
    %v625 = vsel %vm333, %v449, 0
    %v628 = vsel %vm333, %v450, 0
    %v631 = vsel %vm333, %v451, 0
    %v634 = vsel %vm333, %v452, 0
    %v637 = vsel %vm333, %v453, 0
    %v640 = vsel %vm108, %v443, 0
    %642 = vmatprep.subr.mxu0 0.0
    %643 = vmatpush1.msra.mxu0 0.0
    %644 = vmatprep.subr.mxu0 0.0
    %645 = vmatpush1.msra.mxu0 0.0
    %646 = vmatprep.subr.mxu0 0.0
    %647 = vmatpush1.msra.mxu0 0.0
    %648 = vmatprep.subr.mxu0 0.0
    %649 = vmatpush1.msra.mxu0 0.0
    %650 = vmatprep.subr.mxu0 0.0
    %651 = vmatpush1.msra.mxu0 0.0
    %652 = vmatprep.subr.mxu0 0.0
    %653 = vmatpush1.msra.mxu0 0.0
    %654 = vmatprep.subr.mxu0 0.0
    %655 = vmatpush1.msra.mxu0 0.0
    %656 = vmatprep.subr.mxu0 0.0
    %657 = vmatpush1.msra.mxu0 0.0
    %658 = vmatprep.subr.mxu0 0.0
    %659 = vmatpush1.msra.mxu0 0.0
    %660 = vmatprep.subr.mxu0 0.0
    %661 = vmatpush1.msra.mxu0 0.0
    %662 = vmatprep.subr.mxu0 0.0
    %663 = vmatpush1.msra.mxu0 0.0
    %664 = vmatprep.subr.mxu0 0.0
    %665 = vmatpush1.msra.mxu0 0.0
    %666 = vmatprep.subr.mxu0 0.0
    %667 = vmatpush1.msra.mxu0 0.0
    %668 = vmatprep.subr.mxu0 0.0
    %669 = vmatpush1.msra.mxu0 0.0
    %670 = vmatprep.subr.mxu0 0.0
    %671 = vmatpush1.msra.mxu0 %v640
    %672 = vmatprep.subr.mxu0 0.0
    %673 = vmatpush1.msra.mxu0 %v442
    %674 = vmatprep.subr.mxu0 0.0
    %675 = vmatpush2.msra.mxu0 0.0
    %676 = vmatprep.subr.mxu0 0.0
    %677 = vmatpush2.msra.mxu0 0.0
    %678 = vmatprep.subr.mxu0 0.0
    %679 = vmatpush2.msra.mxu0 0.0
    %680 = vmatprep.subr.mxu0 0.0
    %681 = vmatpush2.msra.mxu0 0.0
    %682 = vmatprep.subr.mxu0 0.0
    %683 = vmatpush2.msra.mxu0 0.0
    %684 = vmatprep.subr.mxu0 0.0
    %685 = vmatpush2.msra.mxu0 0.0
    %686 = vmatprep.subr.mxu0 0.0
    %687 = vmatpush2.msra.mxu0 0.0
    %688 = vmatprep.subr.mxu0 0.0
    %689 = vmatpush2.msra.mxu0 0.0
    %690 = vmatprep.subr.mxu0 0.0
    %691 = vmatpush2.msra.mxu0 0.0
    %692 = vmatprep.subr.mxu0 0.0
    %693 = vmatpush2.msra.mxu0 0.0
    %694 = vmatprep.subr.mxu0 0.0
    %695 = vmatpush2.msra.mxu0 0.0
    %696 = vmatprep.subr.mxu0 0.0
    %697 = vmatpush2.msra.mxu0 0.0
    %698 = vmatprep.subr.mxu0 0.0
    %699 = vmatpush2.msra.mxu0 0.0
    %700 = vmatprep.subr.mxu0 0.0
    %701 = vmatpush2.msra.mxu0 0.0
    %702 = vmatprep.subr.mxu0 0.0
    %703 = vmatpush2.msra.mxu0 0.0
    %704 = vmatprep.subr.mxu0 0.0
    %705 = vmatpush2.msra.mxu0 0.0
    %706 = vmatprep.mubr.f32.mxu0 0.0
    %707 = vmatmul.mubr.f32.gmra.mxu0 %v610
    %v708 = vpop.f32.mrf.mxu0
    %v709 = vadd.f32 %v561, %v708
    %v710 = vpop.f32.mrf.mxu0
    %711 = vmatprep.mubr.f32.mxu0 0.0
    %712 = vmatmul.mubr.f32.gmra.mxu0 %v613
    %v713 = vpop.f32.mrf.mxu0
    %v714 = vadd.f32 %v566, %v713
    %v715 = vpop.f32.mrf.mxu0
    %716 = vmatprep.mubr.f32.mxu0 0.0
    %717 = vmatmul.mubr.f32.gmra.mxu0 %v616
    %v718 = vpop.f32.mrf.mxu0
    %v719 = vadd.f32 %v571, %v718
    %v720 = vpop.f32.mrf.mxu0
    %721 = vmatprep.mubr.f32.mxu0 0.0
    %722 = vmatmul.mubr.f32.gmra.mxu0 %v619
    %v723 = vpop.f32.mrf.mxu0
    %v724 = vadd.f32 %v576, %v723
    %v725 = vpop.f32.mrf.mxu0
    %726 = vmatprep.mubr.f32.mxu0 0.0
    %727 = vmatmul.mubr.f32.gmra.mxu0 %v622
    %v728 = vpop.f32.mrf.mxu0
    %v729 = vadd.f32 %v581, %v728
    %v730 = vpop.f32.mrf.mxu0
    %731 = vmatprep.mubr.f32.mxu0 0.0
    %732 = vmatmul.mubr.f32.gmra.mxu0 %v625
    %v733 = vpop.f32.mrf.mxu0
    %v734 = vadd.f32 %v586, %v733
    %v735 = vpop.f32.mrf.mxu0
    %736 = vmatprep.mubr.f32.mxu0 0.0
    %737 = vmatmul.mubr.f32.gmra.mxu0 %v628
    %v738 = vpop.f32.mrf.mxu0
    %v739 = vadd.f32 %v591, %v738
    %v740 = vpop.f32.mrf.mxu0
    %741 = vmatprep.mubr.f32.mxu0 0.0
    %742 = vmatmul.mubr.f32.gmra.mxu0 %v631
    %v743 = vpop.f32.mrf.mxu0
    %v744 = vadd.f32 %v596, %v743
    %v745 = vpop.f32.mrf.mxu0
    %746 = vmatprep.mubr.f32.mxu0 0.0
    %747 = vmatmul.mubr.f32.gmra.mxu0 %v634
    %v748 = vpop.f32.mrf.mxu0
    %v749 = vadd.f32 %v601, %v748
    %v750 = vpop.f32.mrf.mxu0
    %751 = vmatprep.mubr.f32.mxu0 0.0
    %752 = vmatmul.mubr.f32.gmra.mxu0 %v637
    %v753 = vpop.f32.mrf.mxu0
    %v754 = vadd.f32 %v606, %v753
    %v755 = vpop.f32.mrf.mxu0
    %756 = vdwg.mxu0
    %v757 = vld [vmem:[%s9] sm:$0xff]
    %v758 = vld [vmem:[%s9 + $0x8] sm:$0xff]
    %v759 = vld [vmem:[%s9 + $0x10] sm:$0xff]
    %v760 = vld [vmem:[%s9 + $0x18] sm:$0xff]
    %v761 = vld [vmem:[%s9 + $0x20] sm:$0xff]
    %v762 = vld [vmem:[%s9 + $0x28] sm:$0xff]
    %v763 = vld [vmem:[%s9 + $0x30] sm:$0xff]
    %v764 = vld [vmem:[%s9 + $0x38] sm:$0xff]
    %v765 = vld [vmem:[%s9 + $0x40] sm:$0xff]
    %v766 = vld [vmem:[%s9 + $0x48] sm:$0xff]
    %768 = vset.pattern.permute.xlu0 0
    %769 = vperm.xlu0 %768, %v757
    %v770 = vpop.permute.xlu0 %769
    %773 = vset.pattern.permute.xlu0 0
    %774 = vperm.xlu0 %773, %v758
    %v775 = vpop.permute.xlu0 %774
    %778 = vset.pattern.permute.xlu0 0
    %779 = vperm.xlu0 %778, %v759
    %v780 = vpop.permute.xlu0 %779
    %783 = vset.pattern.permute.xlu0 0
    %784 = vperm.xlu0 %783, %v760
    %v785 = vpop.permute.xlu0 %784
    %788 = vset.pattern.permute.xlu0 0
    %789 = vperm.xlu0 %788, %v761
    %v790 = vpop.permute.xlu0 %789
    %793 = vset.pattern.permute.xlu0 0
    %794 = vperm.xlu0 %793, %v762
    %v795 = vpop.permute.xlu0 %794
    %798 = vset.pattern.permute.xlu0 0
    %799 = vperm.xlu0 %798, %v763
    %v800 = vpop.permute.xlu0 %799
    %803 = vset.pattern.permute.xlu0 0
    %804 = vperm.xlu0 %803, %v764
    %v805 = vpop.permute.xlu0 %804
    %808 = vset.pattern.permute.xlu0 0
    %809 = vperm.xlu0 %808, %v765
    %v810 = vpop.permute.xlu0 %809
    %813 = vset.pattern.permute.xlu0 0
    %814 = vperm.xlu0 %813, %v766
    %v815 = vpop.permute.xlu0 %814
    %v817 = vadd.f32 %v709, %v770
    %v818 = vadd.f32 %v714, %v775
    %v819 = vadd.f32 %v719, %v780
    %v820 = vadd.f32 %v724, %v785
    %v821 = vadd.f32 %v729, %v790
    %v822 = vadd.f32 %v734, %v795
    %v823 = vadd.f32 %v739, %v800
    %v824 = vadd.f32 %v744, %v805
    %v825 = vadd.f32 %v749, %v810
    %v826 = vadd.f32 %v754, %v815
    %v827 = vmul.f32 %v817, 0.5
    %v828 = vmul.f32 %v818, 0.5
    %v829 = vmul.f32 %v819, 0.5
    %v830 = vmul.f32 %v820, 0.5
    %v831 = vmul.f32 %v821, 0.5
    %v832 = vmul.f32 %v822, 0.5
    %v833 = vmul.f32 %v823, 0.5
    %v834 = vmul.f32 %v824, 0.5
    %v835 = vmul.f32 %v825, 0.5
    %v836 = vmul.f32 %v826, 0.5
    %v837 = vtanh.pop %v827
    %v838 = vtanh.pop %v828
    %v839 = vtanh.pop %v829
    %v840 = vtanh.pop %v830
    %v841 = vtanh.pop %v831
    %v842 = vtanh.pop %v832
    %v843 = vtanh.pop %v833
    %v844 = vtanh.pop %v834
    %v845 = vtanh.pop %v835
    %v846 = vtanh.pop %v836
    %v847 = vmul.f32 %v837, 0.5
    %v848 = vmul.f32 %v838, 0.5
    %v849 = vmul.f32 %v839, 0.5
    %v850 = vmul.f32 %v840, 0.5
    %v851 = vmul.f32 %v841, 0.5
    %v852 = vmul.f32 %v842, 0.5
    %v853 = vmul.f32 %v843, 0.5
    %v854 = vmul.f32 %v844, 0.5
    %v855 = vmul.f32 %v845, 0.5
    %v856 = vmul.f32 %v846, 0.5
    %v857 = vadd.f32 %v847, 0.5
    %v858 = vadd.f32 %v848, 0.5
    %v859 = vadd.f32 %v849, 0.5
    %v860 = vadd.f32 %v850, 0.5
    %v861 = vadd.f32 %v851, 0.5
    %v862 = vadd.f32 %v852, 0.5
    %v863 = vadd.f32 %v853, 0.5
    %v864 = vadd.f32 %v854, 0.5
    %v865 = vadd.f32 %v855, 0.5
    %v866 = vadd.f32 %v856, 0.5
    %v867 = vld [vmem:[%s10] sm:$0xff]
    %v868 = vld [vmem:[%s10 + $0x8] sm:$0xff]
    %v869 = vld [vmem:[%s10 + $0x10] sm:$0xff]
    %v870 = vld [vmem:[%s10 + $0x18] sm:$0xff]
    %v871 = vld [vmem:[%s10 + $0x20] sm:$0xff]
    %v872 = vld [vmem:[%s10 + $0x28] sm:$0xff]
    %v873 = vld [vmem:[%s10 + $0x30] sm:$0xff]
    %v874 = vld [vmem:[%s10 + $0x38] sm:$0xff]
    %v875 = vld [vmem:[%s10 + $0x40] sm:$0xff]
    %v876 = vld [vmem:[%s10 + $0x48] sm:$0xff]
    %v877 = vld [vmem:[%s11] sm:$0xff]
    %v878 = vld [vmem:[%s11 + $0x8] sm:$0xff]
    %v879 = vld [vmem:[%s11 + $0x10] sm:$0xff]
    %v880 = vld [vmem:[%s11 + $0x18] sm:$0xff]
    %v881 = vld [vmem:[%s11 + $0x20] sm:$0xff]
    %v882 = vld [vmem:[%s11 + $0x28] sm:$0xff]
    %v883 = vld [vmem:[%s11 + $0x30] sm:$0xff]
    %v884 = vld [vmem:[%s11 + $0x38] sm:$0xff]
    %v885 = vld [vmem:[%s11 + $0x40] sm:$0xff]
    %v886 = vld [vmem:[%s11 + $0x48] sm:$0xff]
    %888 = vset.pattern.permute.xlu0 0
    %889 = vperm.xlu0 %888, %v877
    %v890 = vpop.permute.xlu0 %889
    %893 = vset.pattern.permute.xlu0 0
    %894 = vperm.xlu0 %893, %v878
    %v895 = vpop.permute.xlu0 %894
    %898 = vset.pattern.permute.xlu0 0
    %899 = vperm.xlu0 %898, %v879
    %v900 = vpop.permute.xlu0 %899
    %903 = vset.pattern.permute.xlu0 0
    %904 = vperm.xlu0 %903, %v880
    %v905 = vpop.permute.xlu0 %904
    %908 = vset.pattern.permute.xlu0 0
    %909 = vperm.xlu0 %908, %v881
    %v910 = vpop.permute.xlu0 %909
    %913 = vset.pattern.permute.xlu0 0
    %914 = vperm.xlu0 %913, %v882
    %v915 = vpop.permute.xlu0 %914
    %918 = vset.pattern.permute.xlu0 0
    %919 = vperm.xlu0 %918, %v883
    %v920 = vpop.permute.xlu0 %919
    %923 = vset.pattern.permute.xlu0 0
    %924 = vperm.xlu0 %923, %v884
    %v925 = vpop.permute.xlu0 %924
    %928 = vset.pattern.permute.xlu0 0
    %929 = vperm.xlu0 %928, %v885
    %v930 = vpop.permute.xlu0 %929
    %933 = vset.pattern.permute.xlu0 0
    %934 = vperm.xlu0 %933, %v886
    %v935 = vpop.permute.xlu0 %934
    %vm937 = vcmask 654336
    %v939 = vsel %vm937, %v867, 0
    %v942 = vsel %vm937, %v868, 0
    %v945 = vsel %vm937, %v869, 0
    %v948 = vsel %vm937, %v870, 0
    %v951 = vsel %vm937, %v871, 0
    %v954 = vsel %vm937, %v872, 0
    %v957 = vsel %vm937, %v873, 0
    %v960 = vsel %vm937, %v874, 0
    %v963 = vsel %vm937, %v875, 0
    %v966 = vsel %vm937, %v876, 0
    %968 = vmatprep.subr.mxu0 0.0
    %969 = vmatpush1.msra.mxu0 0.0
    %970 = vmatprep.subr.mxu0 0.0
    %971 = vmatpush1.msra.mxu0 0.0
    %972 = vmatprep.subr.mxu0 0.0
    %973 = vmatpush1.msra.mxu0 0.0
    %974 = vmatprep.subr.mxu0 0.0
    %975 = vmatpush1.msra.mxu0 0.0
    %976 = vmatprep.subr.mxu0 0.0
    %977 = vmatpush1.msra.mxu0 0.0
    %978 = vmatprep.subr.mxu0 0.0
    %979 = vmatpush1.msra.mxu0 0.0
    %980 = vmatprep.subr.mxu0 0.0
    %981 = vmatpush1.msra.mxu0 %v866
    %982 = vmatprep.subr.mxu0 0.0
    %983 = vmatpush1.msra.mxu0 %v865
    %984 = vmatprep.subr.mxu0 0.0
    %985 = vmatpush1.msra.mxu0 %v864
    %986 = vmatprep.subr.mxu0 0.0
    %987 = vmatpush1.msra.mxu0 %v863
    %988 = vmatprep.subr.mxu0 0.0
    %989 = vmatpush1.msra.mxu0 %v862
    %990 = vmatprep.subr.mxu0 0.0
    %991 = vmatpush1.msra.mxu0 %v861
    %992 = vmatprep.subr.mxu0 0.0
    %993 = vmatpush1.msra.mxu0 %v860
    %994 = vmatprep.subr.mxu0 0.0
    %995 = vmatpush1.msra.mxu0 %v859
    %996 = vmatprep.subr.mxu0 0.0
    %997 = vmatpush1.msra.mxu0 %v858
    %998 = vmatprep.subr.mxu0 0.0
    %999 = vmatpush1.msra.mxu0 %v857
    %1000 = vmatprep.subr.mxu0 0.0
    %1001 = vmatpush2.msra.mxu0 0.0
    %1002 = vmatprep.subr.mxu0 0.0
    %1003 = vmatpush2.msra.mxu0 0.0
    %1004 = vmatprep.subr.mxu0 0.0
    %1005 = vmatpush2.msra.mxu0 0.0
    %1006 = vmatprep.subr.mxu0 0.0
    %1007 = vmatpush2.msra.mxu0 0.0
    %1008 = vmatprep.subr.mxu0 0.0
    %1009 = vmatpush2.msra.mxu0 0.0
    %1010 = vmatprep.subr.mxu0 0.0
    %1011 = vmatpush2.msra.mxu0 0.0
    %1012 = vmatprep.subr.mxu0 0.0
    %1013 = vmatpush2.msra.mxu0 0.0
    %1014 = vmatprep.subr.mxu0 0.0
    %1015 = vmatpush2.msra.mxu0 0.0
    %1016 = vmatprep.subr.mxu0 0.0
    %1017 = vmatpush2.msra.mxu0 0.0
    %1018 = vmatprep.subr.mxu0 0.0
    %1019 = vmatpush2.msra.mxu0 0.0
    %1020 = vmatprep.subr.mxu0 0.0
    %1021 = vmatpush2.msra.mxu0 0.0
    %1022 = vmatprep.subr.mxu0 0.0
    %1023 = vmatpush2.msra.mxu0 0.0
    %1024 = vmatprep.subr.mxu0 0.0
    %1025 = vmatpush2.msra.mxu0 0.0
    %1026 = vmatprep.subr.mxu0 0.0
    %1027 = vmatpush2.msra.mxu0 0.0
    %1028 = vmatprep.subr.mxu0 0.0
    %1029 = vmatpush2.msra.mxu0 0.0
    %1030 = vmatprep.subr.mxu0 0.0
    %1031 = vmatpush2.msra.mxu0 0.0
    %1032 = vmatprep.mubr.f32.mxu0 0.0
    %1033 = vmatmul.mubr.f32.gmra.mxu0 %v939
    %v1034 = vpop.f32.mrf.mxu0
    %v1035 = vadd.f32 %v890, %v1034
    %v1036 = vpop.f32.mrf.mxu0
    %1037 = vmatprep.mubr.f32.mxu0 0.0
    %1038 = vmatmul.mubr.f32.gmra.mxu0 %v942
    %v1039 = vpop.f32.mrf.mxu0
    %v1040 = vadd.f32 %v895, %v1039
    %v1041 = vpop.f32.mrf.mxu0
    %1042 = vmatprep.mubr.f32.mxu0 0.0
    %1043 = vmatmul.mubr.f32.gmra.mxu0 %v945
    %v1044 = vpop.f32.mrf.mxu0
    %v1045 = vadd.f32 %v900, %v1044
    %v1046 = vpop.f32.mrf.mxu0
    %1047 = vmatprep.mubr.f32.mxu0 0.0
    %1048 = vmatmul.mubr.f32.gmra.mxu0 %v948
    %v1049 = vpop.f32.mrf.mxu0
    %v1050 = vadd.f32 %v905, %v1049
    %v1051 = vpop.f32.mrf.mxu0
    %1052 = vmatprep.mubr.f32.mxu0 0.0
    %1053 = vmatmul.mubr.f32.gmra.mxu0 %v951
    %v1054 = vpop.f32.mrf.mxu0
    %v1055 = vadd.f32 %v910, %v1054
    %v1056 = vpop.f32.mrf.mxu0
    %1057 = vmatprep.mubr.f32.mxu0 0.0
    %1058 = vmatmul.mubr.f32.gmra.mxu0 %v954
    %v1059 = vpop.f32.mrf.mxu0
    %v1060 = vadd.f32 %v915, %v1059
    %v1061 = vpop.f32.mrf.mxu0
    %1062 = vmatprep.mubr.f32.mxu0 0.0
    %1063 = vmatmul.mubr.f32.gmra.mxu0 %v957
    %v1064 = vpop.f32.mrf.mxu0
    %v1065 = vadd.f32 %v920, %v1064
    %v1066 = vpop.f32.mrf.mxu0
    %1067 = vmatprep.mubr.f32.mxu0 0.0
    %1068 = vmatmul.mubr.f32.gmra.mxu0 %v960
    %v1069 = vpop.f32.mrf.mxu0
    %v1070 = vadd.f32 %v925, %v1069
    %v1071 = vpop.f32.mrf.mxu0
    %1072 = vmatprep.mubr.f32.mxu0 0.0
    %1073 = vmatmul.mubr.f32.gmra.mxu0 %v963
    %v1074 = vpop.f32.mrf.mxu0
    %v1075 = vadd.f32 %v930, %v1074
    %v1076 = vpop.f32.mrf.mxu0
    %1077 = vmatprep.mubr.f32.mxu0 0.0
    %1078 = vmatmul.mubr.f32.gmra.mxu0 %v966
    %v1079 = vpop.f32.mrf.mxu0
    %v1080 = vadd.f32 %v935, %v1079
    %v1081 = vpop.f32.mrf.mxu0
    %1082 = vdwg.mxu0
    %v1083 = vmul.f32 %v1035, 0.5
    %v1084 = vmul.f32 %v1040, 0.5
    %v1085 = vmul.f32 %v1045, 0.5
    %v1086 = vmul.f32 %v1050, 0.5
    %v1087 = vmul.f32 %v1055, 0.5
    %v1088 = vmul.f32 %v1060, 0.5
    %v1089 = vmul.f32 %v1065, 0.5
    %v1090 = vmul.f32 %v1070, 0.5
    %v1091 = vmul.f32 %v1075, 0.5
    %v1092 = vmul.f32 %v1080, 0.5
    %v1093 = vtanh.pop %v1083
    %v1094 = vtanh.pop %v1084
    %v1095 = vtanh.pop %v1085
    %v1096 = vtanh.pop %v1086
    %v1097 = vtanh.pop %v1087
    %v1098 = vtanh.pop %v1088
    %v1099 = vtanh.pop %v1089
    %v1100 = vtanh.pop %v1090
    %v1101 = vtanh.pop %v1091
    %v1102 = vtanh.pop %v1092
    %v1103 = vmul.f32 %v1093, 0.5
    %v1104 = vmul.f32 %v1094, 0.5
    %v1105 = vmul.f32 %v1095, 0.5
    %v1106 = vmul.f32 %v1096, 0.5
    %v1107 = vmul.f32 %v1097, 0.5
    %v1108 = vmul.f32 %v1098, 0.5
    %v1109 = vmul.f32 %v1099, 0.5
    %v1110 = vmul.f32 %v1100, 0.5
    %v1111 = vmul.f32 %v1101, 0.5
    %v1112 = vmul.f32 %v1102, 0.5
    %v1113 = vadd.f32 %v1103, 0.5
    %v1114 = vadd.f32 %v1104, 0.5
    %v1115 = vadd.f32 %v1105, 0.5
    %v1116 = vadd.f32 %v1106, 0.5
    %v1117 = vadd.f32 %v1107, 0.5
    %v1118 = vadd.f32 %v1108, 0.5
    %v1119 = vadd.f32 %v1109, 0.5
    %v1120 = vadd.f32 %v1110, 0.5
    %v1121 = vadd.f32 %v1111, 0.5
    %v1122 = vadd.f32 %v1112, 0.5
    %v1123 = vld [vmem:[%s12] sm:$0xff]
    %v1124 = vld [vmem:[%s12 + $0x8] sm:$0xff]
    %v1125 = vld [vmem:[%s12 + $0x10] sm:$0xf]
    %v1126 = vld [vmem:[%s13] sm:$0xff]
    %v1127 = vld [vmem:[%s13 + $0x8] sm:$0xff]
    %v1128 = vld [vmem:[%s13 + $0x10] sm:$0xf]
    %1130 = vset.pattern.permute.xlu0 0
    %1131 = vperm.xlu0 %1130, %v1126
    %v1132 = vpop.permute.xlu0 %1131
    %1135 = vset.pattern.permute.xlu0 0
    %1136 = vperm.xlu0 %1135, %v1127
    %v1137 = vpop.permute.xlu0 %1136
    %1140 = vset.pattern.permute.xlu0 0
    %1141 = vperm.xlu0 %1140, %v1128
    %v1142 = vpop.permute.xlu0 %1141
    %v1145 = vsel %vm937, %v1123, 0
    %v1148 = vsel %vm937, %v1124, 0
    %v1151 = vsel %vm937, %v1125, 0
    %1153 = vmatprep.subr.mxu0 0.0
    %1154 = vmatpush1.msra.mxu0 0.0
    %1155 = vmatprep.subr.mxu0 0.0
    %1156 = vmatpush1.msra.mxu0 0.0
    %1157 = vmatprep.subr.mxu0 0.0
    %1158 = vmatpush1.msra.mxu0 0.0
    %1159 = vmatprep.subr.mxu0 0.0
    %1160 = vmatpush1.msra.mxu0 0.0
    %1161 = vmatprep.subr.mxu0 0.0
    %1162 = vmatpush1.msra.mxu0 0.0
    %1163 = vmatprep.subr.mxu0 0.0
    %1164 = vmatpush1.msra.mxu0 0.0
    %1165 = vmatprep.subr.mxu0 0.0
    %1166 = vmatpush1.msra.mxu0 %v1122
    %1167 = vmatprep.subr.mxu0 0.0
    %1168 = vmatpush1.msra.mxu0 %v1121
    %1169 = vmatprep.subr.mxu0 0.0
    %1170 = vmatpush1.msra.mxu0 %v1120
    %1171 = vmatprep.subr.mxu0 0.0
    %1172 = vmatpush1.msra.mxu0 %v1119
    %1173 = vmatprep.subr.mxu0 0.0
    %1174 = vmatpush1.msra.mxu0 %v1118
    %1175 = vmatprep.subr.mxu0 0.0
    %1176 = vmatpush1.msra.mxu0 %v1117
    %1177 = vmatprep.subr.mxu0 0.0
    %1178 = vmatpush1.msra.mxu0 %v1116
    %1179 = vmatprep.subr.mxu0 0.0
    %1180 = vmatpush1.msra.mxu0 %v1115
    %1181 = vmatprep.subr.mxu0 0.0
    %1182 = vmatpush1.msra.mxu0 %v1114
    %1183 = vmatprep.subr.mxu0 0.0
    %1184 = vmatpush1.msra.mxu0 %v1113
    %1185 = vmatprep.subr.mxu0 0.0
    %1186 = vmatpush2.msra.mxu0 0.0
    %1187 = vmatprep.subr.mxu0 0.0
    %1188 = vmatpush2.msra.mxu0 0.0
    %1189 = vmatprep.subr.mxu0 0.0
    %1190 = vmatpush2.msra.mxu0 0.0
    %1191 = vmatprep.subr.mxu0 0.0
    %1192 = vmatpush2.msra.mxu0 0.0
    %1193 = vmatprep.subr.mxu0 0.0
    %1194 = vmatpush2.msra.mxu0 0.0
    %1195 = vmatprep.subr.mxu0 0.0
    %1196 = vmatpush2.msra.mxu0 0.0
    %1197 = vmatprep.subr.mxu0 0.0
    %1198 = vmatpush2.msra.mxu0 0.0
    %1199 = vmatprep.subr.mxu0 0.0
    %1200 = vmatpush2.msra.mxu0 0.0
    %1201 = vmatprep.subr.mxu0 0.0
    %1202 = vmatpush2.msra.mxu0 0.0
    %1203 = vmatprep.subr.mxu0 0.0
    %1204 = vmatpush2.msra.mxu0 0.0
    %1205 = vmatprep.subr.mxu0 0.0
    %1206 = vmatpush2.msra.mxu0 0.0
    %1207 = vmatprep.subr.mxu0 0.0
    %1208 = vmatpush2.msra.mxu0 0.0
    %1209 = vmatprep.subr.mxu0 0.0
    %1210 = vmatpush2.msra.mxu0 0.0
    %1211 = vmatprep.subr.mxu0 0.0
    %1212 = vmatpush2.msra.mxu0 0.0
    %1213 = vmatprep.subr.mxu0 0.0
    %1214 = vmatpush2.msra.mxu0 0.0
    %1215 = vmatprep.subr.mxu0 0.0
    %1216 = vmatpush2.msra.mxu0 0.0
    %1217 = vmatprep.mubr.f32.mxu0 0.0
    %1218 = vmatmul.mubr.f32.gmra.mxu0 %v1145
    %v1219 = vpop.f32.mrf.mxu0
    %v1220 = vadd.f32 %v1132, %v1219
    %v1221 = vpop.f32.mrf.mxu0
    %1222 = vmatprep.mubr.f32.mxu0 0.0
    %1223 = vmatmul.mubr.f32.gmra.mxu0 %v1148
    %v1224 = vpop.f32.mrf.mxu0
    %v1225 = vadd.f32 %v1137, %v1224
    %v1226 = vpop.f32.mrf.mxu0
    %1227 = vmatprep.mubr.f32.mxu0 0.0
    %1228 = vmatmul.mubr.f32.gmra.mxu0 %v1151
    %v1229 = vpop.f32.mrf.mxu0
    %v1230 = vadd.f32 %v1142, %v1229
    %v1231 = vpop.f32.mrf.mxu0
    %1232 = vdwg.mxu0
    %v1233 = vmul.f32 %v1220, 0.5
    %v1234 = vmul.f32 %v1225, 0.5
    %v1235 = vmul.f32 %v1230, 0.5
    %v1236 = vtanh.pop %v1233
    %v1237 = vtanh.pop %v1234
    %v1238 = vtanh.pop %v1235
    %v1239 = vmul.f32 %v1236, 0.5
    %v1240 = vmul.f32 %v1237, 0.5
    %v1241 = vmul.f32 %v1238, 0.5
    %v1242 = vadd.f32 %v1239, 0.5
    %v1243 = vadd.f32 %v1240, 0.5
    %v1244 = vadd.f32 %v1241, 0.5
    %v1245 = vld [vmem:[%s14] sm:$0xff]
    %v1246 = vld [vmem:[%s15] sm:$0xff]
    %1248 = vset.pattern.permute.xlu0 0
    %1249 = vperm.xlu0 %1248, %v1246
    %v1250 = vpop.permute.xlu0 %1249
    %vm1252 = vcmask 162816
    %v1254 = vsel %vm1252, %v1245, 0
    %vm1256 = vcmask 1043456
    %v1258 = vsel %vm1256, %v1244, 0
    %1260 = vmatprep.subr.mxu0 0.0
    %1261 = vmatpush1.msra.mxu0 0.0
    %1262 = vmatprep.subr.mxu0 0.0
    %1263 = vmatpush1.msra.mxu0 0.0
    %1264 = vmatprep.subr.mxu0 0.0
    %1265 = vmatpush1.msra.mxu0 0.0
    %1266 = vmatprep.subr.mxu0 0.0
    %1267 = vmatpush1.msra.mxu0 0.0
    %1268 = vmatprep.subr.mxu0 0.0
    %1269 = vmatpush1.msra.mxu0 0.0
    %1270 = vmatprep.subr.mxu0 0.0
    %1271 = vmatpush1.msra.mxu0 0.0
    %1272 = vmatprep.subr.mxu0 0.0
    %1273 = vmatpush1.msra.mxu0 0.0
    %1274 = vmatprep.subr.mxu0 0.0
    %1275 = vmatpush1.msra.mxu0 0.0
    %1276 = vmatprep.subr.mxu0 0.0
    %1277 = vmatpush1.msra.mxu0 0.0
    %1278 = vmatprep.subr.mxu0 0.0
    %1279 = vmatpush1.msra.mxu0 0.0
    %1280 = vmatprep.subr.mxu0 0.0
    %1281 = vmatpush1.msra.mxu0 0.0
    %1282 = vmatprep.subr.mxu0 0.0
    %1283 = vmatpush1.msra.mxu0 0.0
    %1284 = vmatprep.subr.mxu0 0.0
    %1285 = vmatpush1.msra.mxu0 0.0
    %1286 = vmatprep.subr.mxu0 0.0
    %1287 = vmatpush1.msra.mxu0 %v1258
    %1288 = vmatprep.subr.mxu0 0.0
    %1289 = vmatpush1.msra.mxu0 %v1243
    %1290 = vmatprep.subr.mxu0 0.0
    %1291 = vmatpush1.msra.mxu0 %v1242
    %1292 = vmatprep.subr.mxu0 0.0
    %1293 = vmatpush2.msra.mxu0 0.0
    %1294 = vmatprep.subr.mxu0 0.0
    %1295 = vmatpush2.msra.mxu0 0.0
    %1296 = vmatprep.subr.mxu0 0.0
    %1297 = vmatpush2.msra.mxu0 0.0
    %1298 = vmatprep.subr.mxu0 0.0
    %1299 = vmatpush2.msra.mxu0 0.0
    %1300 = vmatprep.subr.mxu0 0.0
    %1301 = vmatpush2.msra.mxu0 0.0
    %1302 = vmatprep.subr.mxu0 0.0
    %1303 = vmatpush2.msra.mxu0 0.0
    %1304 = vmatprep.subr.mxu0 0.0
    %1305 = vmatpush2.msra.mxu0 0.0
    %1306 = vmatprep.subr.mxu0 0.0
    %1307 = vmatpush2.msra.mxu0 0.0
    %1308 = vmatprep.subr.mxu0 0.0
    %1309 = vmatpush2.msra.mxu0 0.0
    %1310 = vmatprep.subr.mxu0 0.0
    %1311 = vmatpush2.msra.mxu0 0.0
    %1312 = vmatprep.subr.mxu0 0.0
    %1313 = vmatpush2.msra.mxu0 0.0
    %1314 = vmatprep.subr.mxu0 0.0
    %1315 = vmatpush2.msra.mxu0 0.0
    %1316 = vmatprep.subr.mxu0 0.0
    %1317 = vmatpush2.msra.mxu0 0.0
    %1318 = vmatprep.subr.mxu0 0.0
    %1319 = vmatpush2.msra.mxu0 0.0
    %1320 = vmatprep.subr.mxu0 0.0
    %1321 = vmatpush2.msra.mxu0 0.0
    %1322 = vmatprep.subr.mxu0 0.0
    %1323 = vmatpush2.msra.mxu0 0.0
    %1324 = vmatprep.mubr.f32.mxu0 0.0
    %1325 = vmatmul.mubr.f32.gmra.mxu0 %v1254
    %v1326 = vpop.f32.mrf.mxu0
    %v1327 = vadd.f32 %v1250, %v1326
    %v1328 = vpop.f32.mrf.mxu0
    %1329 = vdwg.mxu0
    %1330 = vst [vmem:[#allocation2] sm:$0xff] %v416
    %1331 = vst [vmem:[#allocation2 + $0x8] sm:$0xff] %v421
    %1332 = vst [vmem:[#allocation2 + $0x10] sm:$0xff] %v426
    %1333 = vst [vmem:[#allocation2 + $0x18] sm:$0xff] %v431
    %1334 = vst [vmem:[#allocation2 + $0x20] sm:$0xff] %v1327
    // Predicated region
    $region66: #{tpu_custom_call.1} parent=1 // pred_check
      _
    $region67: #{tpu_custom_call.1} parent=1 // pred_check_branch
      %1336 = sbr.rel (0) target = $region69
    $region68: #{tpu_custom_call.1} parent=1 // pred_region
      %s1338 = ssub.s32 640, 640
      %1339 = vsyncadd [#allocation3], %s1338
      %s1340 = sshll.u32 [#allocation2], 4
      %s1341 = int_to_ptr.vmem [resolvable:$true] %s1340
      %1346 = dma.vmem_to_hbm [thread:$0]  %s1341, 640, %s16, [#allocation3], 128, 128, 8
    $region69: #{tpu_custom_call.1} parent=1 // pred_fallthru
      _
    // Predicated region
    $region70: #{tpu_custom_call.1} parent=1 // pred_check
      _
    $region71: #{tpu_custom_call.1} parent=1 // pred_check_branch
      %1348 = sbr.rel (0) target = $region73
    $region72: #{tpu_custom_call.1} parent=1 // pred_region
      %1349 = dma.done [#allocation3], 640
    $region73: #{tpu_custom_call.1} parent=1 // pred_fallthru
      _
    %1350 = vsyncpa [#allocation3], 1

</llo_original>
